<compile_context>
chip_gen: v7x
topology: tpu7x:2x2x1
jax: 0.10.0
libtpu: 0.0.40
codegen_flags: <defaults>
</compile_context>

<pallas_src>
import jax
import jax.numpy as jnp
from jax.experimental import pallas as pl
from jax.experimental.pallas import tpu as pltpu

NUM_PARAM = 39
PAD_PARAM = 128                      # lane-dense padded param width
NUM_FEATURES = 576
HIDDEN = NUM_FEATURES // 2           # 288
NUM_ITERS = 3
MAX_BATCH_SIZE = 80


# ----------------------------------------------------------------------------
# Kernel
# ----------------------------------------------------------------------------
def _regressor_kernel(feat_ref,
                      w1f_ref, w1p_ref, b1_ref,
                      w2_ref, b2_ref,
                      w3_ref, b3_ref,
                      out_ref):
    """3 IEF iterations of: param += MLP(concat([feat, param])), param0 = 0.

    fc_blocks = Linear(615->288) + ReLU (+dropout=id)
              + Linear(288->288) + ReLU (+dropout=id)
              + Linear(288->39)   (param axis padded to 128 lanes)
    """
    # Hoist all ref loads above the static unroll so the 3 iterations reuse vregs
    # instead of re-issuing VMEM loads / bias broadcasts.
    feat_bf = feat_ref[...]                        # (B, 576) bf16 (cast in wrapper)
    w1f = w1f_ref[...]                             # (576, 288) bf16
    w1p = w1p_ref[...]                             # (128, 288) bf16 (rows 39: zero)
    b1 = b1_ref[...]                               # (1, 288)   f32
    w2 = w2_ref[...]                               # (288, 288) bf16
    b2 = b2_ref[...]                               # (1, 288)   f32
    w3 = w3_ref[...]                               # (288, 128) bf16 (cols 39: zero)
    b3 = b3_ref[...]                               # (1, 128)   bf16 (cols 39: zero)

    # Loop-invariant first-layer feature term (~60% of FLOPs), identical each iter.
    h1_pre = jnp.dot(feat_bf, w1f, preferred_element_type=jnp.float32) + b1

    param = None                                   # mean_param is zeros by construction
    for it in range(NUM_ITERS):                    # static unroll: num_iters = 3
        if it == 0:
            h1 = h1_pre                            # param == 0 -> param @ W1p == 0
        else:
            h1 = h1_pre + jnp.dot(param.astype(jnp.bfloat16), w1p,
                                  preferred_element_type=jnp.float32)
        h1 = jnp.maximum(h1, 0.0)                  # ReLU (use_ac_func[0]=True)

        h2 = jnp.dot(h1.astype(jnp.bfloat16), w2,
                     preferred_element_type=jnp.float32) + b2
        h2 = jnp.maximum(h2, 0.0)                  # ReLU (use_ac_func[1]=True)

        delta = jnp.dot(h2.astype(jnp.bfloat16), w3,
                        preferred_element_type=jnp.float32) + b3

        param = delta if it == 0 else param + delta   # IEF residual update
        out_ref[it, :, :] = param                      # params.append(param)


# ----------------------------------------------------------------------------
# Wrapper
# ----------------------------------------------------------------------------
def regressor_pallas(features, kparams):
    """Run the Regressor forward. Returns (NUM_ITERS, B, 39) float32."""
    bs = features.shape[0]
    assert bs <= MAX_BATCH_SIZE, f"batch {bs} exceeds max_batch_size={MAX_BATCH_SIZE}"
    bs_pad = ((bs + 15) // 16) * 16                # bf16 LHS packs 16 rows per vreg

    feat = features.astype(jnp.bfloat16)           # ship activations as bf16
    if bs_pad != bs:
        feat = jnp.pad(feat, ((0, bs_pad - bs), (0, 0)))

    flops = (2 * bs_pad * NUM_FEATURES * HIDDEN                        # hoisted W1f
             + (NUM_ITERS - 1) * 2 * bs_pad * PAD_PARAM * HIDDEN       # param @ W1p
             + NUM_ITERS * 2 * bs_pad * HIDDEN * HIDDEN                # h1 @ W2
             + NUM_ITERS * 2 * bs_pad * HIDDEN * PAD_PARAM)            # h2 @ W3
    bytes_accessed = (
        kparams["w1f"].size * 2 + kparams["w1p"].size * 2
        + kparams["w2"].size * 2 + kparams["w3"].size * 2
        + kparams["b1"].size * 4 + kparams["b2"].size * 4 + kparams["b3"].size * 2
        + feat.size * 2
        + NUM_ITERS * bs_pad * PAD_PARAM * 4)

    vmem = pl.BlockSpec(memory_space=pltpu.MemorySpace.VMEM)
    out = pl.pallas_call(
        _regressor_kernel,
        out_shape=jax.ShapeDtypeStruct((NUM_ITERS, bs_pad, PAD_PARAM), jnp.float32),
        in_specs=[vmem] * 8,
        out_specs=vmem,
        cost_estimate=pl.CostEstimate(flops=flops, transcendentals=0,
                                      bytes_accessed=bytes_accessed),
    )(feat,
      kparams["w1f"], kparams["w1p"], kparams["b1"],
      kparams["w2"], kparams["b2"],
      kparams["w3"], kparams["b3"])

    return out[:, :bs, :NUM_PARAM]


# ----------------------------------------------------------------------------
# Weights
# ----------------------------------------------------------------------------
def init_params(key):
    """Deterministic f32 init for fc_layers=[615, 288, 288, 39] (original layout)."""
    ks = jax.random.split(key, 6)
    s = 0.02
    return {
        "w1": s * jax.random.normal(ks[0], (NUM_FEATURES + NUM_PARAM, HIDDEN), jnp.float32),
        "b1": s * jax.random.normal(ks[1], (1, HIDDEN), jnp.float32),
        "w2": s * jax.random.normal(ks[2], (HIDDEN, HIDDEN), jnp.float32),
        "b2": s * jax.random.normal(ks[3], (1, HIDDEN), jnp.float32),
        "w3": s * jax.random.normal(ks[4], (HIDDEN, NUM_PARAM), jnp.float32),
        "b3": s * jax.random.normal(ks[5], (1, NUM_PARAM), jnp.float32),
    }


def pack_params(p):
    """Split/pad/cast the f32 weights into the kernel's bf16 lane-dense layout."""
    w1f = p["w1"][:NUM_FEATURES, :]                                     # (576, 288)
    w1p = p["w1"][NUM_FEATURES:, :]                                     # (39, 288)
    w1p_pad = jnp.pad(w1p, ((0, PAD_PARAM - NUM_PARAM), (0, 0)))        # (128, 288)
    w3_pad = jnp.pad(p["w3"], ((0, 0), (0, PAD_PARAM - NUM_PARAM)))     # (288, 128)
    b3_pad = jnp.pad(p["b3"], ((0, 0), (0, PAD_PARAM - NUM_PARAM)))     # (1, 128)

    kp = {
        "w1f": w1f.astype(jnp.bfloat16),
        "w1p": w1p_pad.astype(jnp.bfloat16),
        "b1": p["b1"].astype(jnp.float32),
        "w2": p["w2"].astype(jnp.bfloat16),
        "b2": p["b2"].astype(jnp.float32),
        "w3": w3_pad.astype(jnp.bfloat16),
        "b3": b3_pad.astype(jnp.bfloat16),
    }
    # Padded-lane invariant (param cols >= 39 must stay exactly zero in-kernel).
    assert float(jnp.max(jnp.abs(kp["w1p"][NUM_PARAM:, :].astype(jnp.float32)))) == 0.0
    assert float(jnp.max(jnp.abs(kp["w3"][:, NUM_PARAM:].astype(jnp.float32)))) == 0.0
    assert float(jnp.max(jnp.abs(kp["b3"][:, NUM_PARAM:].astype(jnp.float32)))) == 0.0
    return kp


# ----------------------------------------------------------------------------
# References
# ----------------------------------------------------------------------------
def regressor_reference_f32(features, p):
    """Plain-JAX f32 reference mirroring the original Regressor.forward (eval)."""
    bs = features.shape[0]
    param = jnp.zeros((bs, NUM_PARAM), jnp.float32)      # mean_param[:bs, :] == 0
    outs = []
    for _ in range(NUM_ITERS):
        total = jnp.concatenate([features, param], axis=1)
        h1 = jnp.maximum(total @ p["w1"] + p["b1"], 0.0)
        h2 = jnp.maximum(h1 @ p["w2"] + p["b2"], 0.0)
        param = param + (h2 @ p["w3"] + p["b3"])
        outs.append(param)
    return jnp.stack(outs, axis=0)


def regressor_reference_bf16(features, kp):
    """Plain-JAX reference using the exact bf16/padded math the kernel performs."""
    bs = features.shape[0]
    feat_bf = features.astype(jnp.bfloat16)
    h1_pre = jnp.dot(feat_bf, kp["w1f"], preferred_element_type=jnp.float32) + kp["b1"]
    param = None
    outs = []
    for it in range(NUM_ITERS):
        if it == 0:
            h1 = h1_pre
        else:
            h1 = h1_pre + jnp.dot(param.astype(jnp.bfloat16), kp["w1p"],
                                  preferred_element_type=jnp.float32)
        h1 = jnp.maximum(h1, 0.0)
        h2 = jnp.maximum(
            jnp.dot(h1.astype(jnp.bfloat16), kp["w2"],
                    preferred_element_type=jnp.float32) + kp["b2"], 0.0)
        delta = jnp.dot(h2.astype(jnp.bfloat16), kp["w3"],
                        preferred_element_type=jnp.float32) + kp["b3"]
        param = delta if it == 0 else param + delta
        outs.append(param[:, :NUM_PARAM])
    return jnp.stack(outs, axis=0)


# ----------------------------------------------------------------------------
# HMR forward (minus untranslated encoder / MANO)
# ----------------------------------------------------------------------------
def hmr_forward(features, kparams):
    params = regressor_pallas(features, kparams)
    final = params[-1]
    # compute_results() parameter split (glue, plain JAX):
    scale = final[:, 0]
    trans = final[:, 1:3]
    rvec = final[:, 3:6]
    beta = final[:, 6:16]
    ang = final[:, 16:]
    # TODO(synk): MANO(beta, pose, rvec) -> vert/joint and keypt projection omitted
    #             (MANO code not provided).
    return scale, trans, rvec, beta, ang, final, params


if __name__ == "__main__":
    key = jax.random.PRNGKey(0)
    k_feat, k_w = jax.random.split(key)

    B = 8  # small batch (<= max_batch_size=80)
    # Stand-in for mobilenetv3_small(images) output: (B, 576) features.
    features = jax.random.normal(k_feat, (B, NUM_FEATURES), jnp.float32)

    weights_f32 = init_params(k_w)
    kparams = pack_params(weights_f32)

    scale, trans, rvec, beta, ang, final_param, all_params = hmr_forward(
        features, kparams)
    jax.block_until_ready(final_param)

    assert all_params.shape == (NUM_ITERS, B, NUM_PARAM)
    assert final_param.shape == (B, NUM_PARAM)
    assert ang.shape == (B, NUM_PARAM - 16)

    # 1) Kernel vs JAX reference running identical bf16/padded math (tight).
    ref_bf = regressor_reference_bf16(features, kparams)
    err_bf = float(jnp.max(jnp.abs(all_params - ref_bf)))
    assert err_bf < 1e-3, f"mismatch vs bf16-matched reference: {err_bf}"

    # 2) Kernel vs original full-f32 Regressor math (bf16-weight drift bound).
    ref_f32 = regressor_reference_f32(features, weights_f32)
    err_f32 = float(jnp.max(jnp.abs(all_params - ref_f32)))
    assert err_f32 < 2e-2, f"mismatch vs f32 reference: {err_f32}"

    print("KERNEL_OK")
</pallas_src>

<mosaic_0001>
module attributes {stable_mosaic.version = 11 : i64} {
  func.func @_regressor_kernel(%arg0: memref<16x576xbf16, #tpu.memory_space<vmem>>, %arg1: memref<576x288xbf16, #tpu.memory_space<vmem>>, %arg2: memref<128x288xbf16, #tpu.memory_space<vmem>>, %arg3: memref<1x288xf32, #tpu.memory_space<vmem>>, %arg4: memref<288x288xbf16, #tpu.memory_space<vmem>>, %arg5: memref<1x288xf32, #tpu.memory_space<vmem>>, %arg6: memref<288x128xbf16, #tpu.memory_space<vmem>>, %arg7: memref<1x128xbf16, #tpu.memory_space<vmem>>, %arg8: memref<3x16x128xf32, #tpu.memory_space<vmem>>) attributes {dimension_semantics = [], scalar_prefetch = 0 : i64, scratch_operands = 0 : i64, tpu.core_type = #tpu.core_type<tc>} {
    %c0 = arith.constant 0 : index
    %c0_0 = arith.constant 0 : index
    %0 = vector.load %arg0[%c0, %c0_0] : memref<16x576xbf16, #tpu.memory_space<vmem>>, vector<16x576xbf16>
    %c0_1 = arith.constant 0 : index
    %c0_2 = arith.constant 0 : index
    %1 = vector.load %arg1[%c0_1, %c0_2] : memref<576x288xbf16, #tpu.memory_space<vmem>>, vector<576x288xbf16>
    %c0_3 = arith.constant 0 : index
    %c0_4 = arith.constant 0 : index
    %2 = vector.load %arg2[%c0_3, %c0_4] : memref<128x288xbf16, #tpu.memory_space<vmem>>, vector<128x288xbf16>
    %c0_5 = arith.constant 0 : index
    %c0_6 = arith.constant 0 : index
    %3 = vector.load %arg3[%c0_5, %c0_6] : memref<1x288xf32, #tpu.memory_space<vmem>>, vector<1x288xf32>
    %c0_7 = arith.constant 0 : index
    %c0_8 = arith.constant 0 : index
    %4 = vector.load %arg4[%c0_7, %c0_8] : memref<288x288xbf16, #tpu.memory_space<vmem>>, vector<288x288xbf16>
    %c0_9 = arith.constant 0 : index
    %c0_10 = arith.constant 0 : index
    %5 = vector.load %arg5[%c0_9, %c0_10] : memref<1x288xf32, #tpu.memory_space<vmem>>, vector<1x288xf32>
    %c0_11 = arith.constant 0 : index
    %c0_12 = arith.constant 0 : index
    %6 = vector.load %arg6[%c0_11, %c0_12] : memref<288x128xbf16, #tpu.memory_space<vmem>>, vector<288x128xbf16>
    %c0_13 = arith.constant 0 : index
    %c0_14 = arith.constant 0 : index
    %7 = vector.load %arg7[%c0_13, %c0_14] : memref<1x128xbf16, #tpu.memory_space<vmem>>, vector<1x128xbf16>
    %cst = arith.constant dense<0.000000e+00> : vector<16x288xf32>
    %8 = tpu.matmul %0, %1, %cst {dimension_numbers = #tpu.dot_dimension_numbers<[1], [0], [0], [1], [0, 0, 1, 1], [], []>} : vector<16x576xbf16>, vector<576x288xbf16>, vector<16x288xf32> -> vector<16x288xf32>
    %9 = vector.broadcast %3 : vector<1x288xf32> to vector<16x288xf32>
    %10 = arith.addf %8, %9 : vector<16x288xf32>
    %cst_15 = arith.constant 0.000000e+00 : f32
    %11 = vector.broadcast %cst_15 : f32 to vector<16x288xf32>
    %12 = arith.maximumf %10, %11 : vector<16x288xf32>
    %13 = arith.truncf %12 : vector<16x288xf32> to vector<16x288xbf16>
    %cst_16 = arith.constant dense<0.000000e+00> : vector<16x288xf32>
    %14 = tpu.matmul %13, %4, %cst_16 {dimension_numbers = #tpu.dot_dimension_numbers<[1], [0], [0], [1], [0, 0, 1, 1], [], []>} : vector<16x288xbf16>, vector<288x288xbf16>, vector<16x288xf32> -> vector<16x288xf32>
    %15 = vector.broadcast %5 : vector<1x288xf32> to vector<16x288xf32>
    %16 = arith.addf %14, %15 : vector<16x288xf32>
    %cst_17 = arith.constant 0.000000e+00 : f32
    %17 = vector.broadcast %cst_17 : f32 to vector<16x288xf32>
    %18 = arith.maximumf %16, %17 : vector<16x288xf32>
    %19 = arith.truncf %18 : vector<16x288xf32> to vector<16x288xbf16>
    %cst_18 = arith.constant dense<0.000000e+00> : vector<16x128xf32>
    %20 = tpu.matmul %19, %6, %cst_18 {dimension_numbers = #tpu.dot_dimension_numbers<[1], [0], [0], [1], [0, 0, 1, 1], [], []>} : vector<16x288xbf16>, vector<288x128xbf16>, vector<16x128xf32> -> vector<16x128xf32>
    %21 = arith.extf %7 : vector<1x128xbf16> to vector<1x128xf32>
    %22 = vector.broadcast %21 : vector<1x128xf32> to vector<16x128xf32>
    %23 = arith.addf %20, %22 : vector<16x128xf32>
    %c0_19 = arith.constant 0 : index
    %c0_20 = arith.constant 0 : index
    %c0_21 = arith.constant 0 : index
    %24 = vector.load %arg8[%c0_19, %c0_20, %c0_21] : memref<3x16x128xf32, #tpu.memory_space<vmem>>, vector<1x16x128xf32>
    %25 = vector.shape_cast %24 : vector<1x16x128xf32> to vector<16x128xf32>
    %26 = vector.shape_cast %23 : vector<16x128xf32> to vector<1x16x128xf32>
    tpu.vector_store %arg8[%c0_19, %c0_20, %c0_21], %26 {strides = array<i32>} : memref<3x16x128xf32, #tpu.memory_space<vmem>>, vector<1x16x128xf32>,
    %27 = arith.truncf %23 : vector<16x128xf32> to vector<16x128xbf16>
    %cst_22 = arith.constant dense<0.000000e+00> : vector<16x288xf32>
    %28 = tpu.matmul %27, %2, %cst_22 {dimension_numbers = #tpu.dot_dimension_numbers<[1], [0], [0], [1], [0, 0, 1, 1], [], []>} : vector<16x128xbf16>, vector<128x288xbf16>, vector<16x288xf32> -> vector<16x288xf32>
    %29 = arith.addf %10, %28 : vector<16x288xf32>
    %cst_23 = arith.constant 0.000000e+00 : f32
    %30 = vector.broadcast %cst_23 : f32 to vector<16x288xf32>
    %31 = arith.maximumf %29, %30 : vector<16x288xf32>
    %32 = arith.truncf %31 : vector<16x288xf32> to vector<16x288xbf16>
    %cst_24 = arith.constant dense<0.000000e+00> : vector<16x288xf32>
    %33 = tpu.matmul %32, %4, %cst_24 {dimension_numbers = #tpu.dot_dimension_numbers<[1], [0], [0], [1], [0, 0, 1, 1], [], []>} : vector<16x288xbf16>, vector<288x288xbf16>, vector<16x288xf32> -> vector<16x288xf32>
    %34 = vector.broadcast %5 : vector<1x288xf32> to vector<16x288xf32>
    %35 = arith.addf %33, %34 : vector<16x288xf32>
    %cst_25 = arith.constant 0.000000e+00 : f32
    %36 = vector.broadcast %cst_25 : f32 to vector<16x288xf32>
    %37 = arith.maximumf %35, %36 : vector<16x288xf32>
    %38 = arith.truncf %37 : vector<16x288xf32> to vector<16x288xbf16>
    %cst_26 = arith.constant dense<0.000000e+00> : vector<16x128xf32>
    %39 = tpu.matmul %38, %6, %cst_26 {dimension_numbers = #tpu.dot_dimension_numbers<[1], [0], [0], [1], [0, 0, 1, 1], [], []>} : vector<16x288xbf16>, vector<288x128xbf16>, vector<16x128xf32> -> vector<16x128xf32>
    %40 = arith.extf %7 : vector<1x128xbf16> to vector<1x128xf32>
    %41 = vector.broadcast %40 : vector<1x128xf32> to vector<16x128xf32>
    %42 = arith.addf %39, %41 : vector<16x128xf32>
    %43 = arith.addf %23, %42 : vector<16x128xf32>
    %c1 = arith.constant 1 : index
    %c0_27 = arith.constant 0 : index
    %c0_28 = arith.constant 0 : index
    %44 = vector.load %arg8[%c1, %c0_27, %c0_28] : memref<3x16x128xf32, #tpu.memory_space<vmem>>, vector<1x16x128xf32>
    %45 = vector.shape_cast %44 : vector<1x16x128xf32> to vector<16x128xf32>
    %46 = vector.shape_cast %43 : vector<16x128xf32> to vector<1x16x128xf32>
    tpu.vector_store %arg8[%c1, %c0_27, %c0_28], %46 {strides = array<i32>} : memref<3x16x128xf32, #tpu.memory_space<vmem>>, vector<1x16x128xf32>,
    %47 = arith.truncf %43 : vector<16x128xf32> to vector<16x128xbf16>
    %cst_29 = arith.constant dense<0.000000e+00> : vector<16x288xf32>
    %48 = tpu.matmul %47, %2, %cst_29 {dimension_numbers = #tpu.dot_dimension_numbers<[1], [0], [0], [1], [0, 0, 1, 1], [], []>} : vector<16x128xbf16>, vector<128x288xbf16>, vector<16x288xf32> -> vector<16x288xf32>
    %49 = arith.addf %10, %48 : vector<16x288xf32>
    %cst_30 = arith.constant 0.000000e+00 : f32
    %50 = vector.broadcast %cst_30 : f32 to vector<16x288xf32>
    %51 = arith.maximumf %49, %50 : vector<16x288xf32>
    %52 = arith.truncf %51 : vector<16x288xf32> to vector<16x288xbf16>
    %cst_31 = arith.constant dense<0.000000e+00> : vector<16x288xf32>
    %53 = tpu.matmul %52, %4, %cst_31 {dimension_numbers = #tpu.dot_dimension_numbers<[1], [0], [0], [1], [0, 0, 1, 1], [], []>} : vector<16x288xbf16>, vector<288x288xbf16>, vector<16x288xf32> -> vector<16x288xf32>
    %54 = vector.broadcast %5 : vector<1x288xf32> to vector<16x288xf32>
    %55 = arith.addf %53, %54 : vector<16x288xf32>
    %cst_32 = arith.constant 0.000000e+00 : f32
    %56 = vector.broadcast %cst_32 : f32 to vector<16x288xf32>
    %57 = arith.maximumf %55, %56 : vector<16x288xf32>
    %58 = arith.truncf %57 : vector<16x288xf32> to vector<16x288xbf16>
    %cst_33 = arith.constant dense<0.000000e+00> : vector<16x128xf32>
    %59 = tpu.matmul %58, %6, %cst_33 {dimension_numbers = #tpu.dot_dimension_numbers<[1], [0], [0], [1], [0, 0, 1, 1], [], []>} : vector<16x288xbf16>, vector<288x128xbf16>, vector<16x128xf32> -> vector<16x128xf32>
    %60 = arith.extf %7 : vector<1x128xbf16> to vector<1x128xf32>
    %61 = vector.broadcast %60 : vector<1x128xf32> to vector<16x128xf32>
    %62 = arith.addf %59, %61 : vector<16x128xf32>
    %63 = arith.addf %43, %62 : vector<16x128xf32>
    %c2 = arith.constant 2 : index
    %c0_34 = arith.constant 0 : index
    %c0_35 = arith.constant 0 : index
    %64 = vector.load %arg8[%c2, %c0_34, %c0_35] : memref<3x16x128xf32, #tpu.memory_space<vmem>>, vector<1x16x128xf32>
    %65 = vector.shape_cast %64 : vector<1x16x128xf32> to vector<16x128xf32>
    %66 = vector.shape_cast %63 : vector<16x128xf32> to vector<1x16x128xf32>
    tpu.vector_store %arg8[%c2, %c0_34, %c0_35], %66 {strides = array<i32>} : memref<3x16x128xf32, #tpu.memory_space<vmem>>, vector<1x16x128xf32>,
    return
  }
}

</mosaic_0001>

<llo_original>
// kernel: tpu_custom_call.1
$region0: #{tpu_custom_call.1}
  #allocation0 [shape = 'u32[]', space=smem, size = 0x4, offset = 0x4, fixed_abs, tag = 'smem constant byte address 0x4 - core index']
  #allocation1 [shape = 'u32[144,128]{1,0:T(1,128)}', space=vmem, size = 0x12000, scoped, tag = 'internal scratch']
  %s0 = inlined_call_operand.vmem [shape: bf16[16,576], index: 0, kind: input, shape index: {}]
  %s1 = inlined_call_operand.vmem [shape: bf16[576,288], index: 1, kind: input, shape index: {}]
  %s2 = inlined_call_operand.vmem [shape: bf16[128,288], index: 2, kind: input, shape index: {}]
  %s3 = inlined_call_operand.vmem [shape: f32[1,288], index: 3, kind: input, shape index: {}]
  %s4 = inlined_call_operand.vmem [shape: bf16[288,288], index: 4, kind: input, shape index: {}]
  %s5 = inlined_call_operand.vmem [shape: f32[1,288], index: 5, kind: input, shape index: {}]
  %s6 = inlined_call_operand.vmem [shape: bf16[288,128], index: 6, kind: input, shape index: {}]
  %s7 = inlined_call_operand.vmem [shape: bf16[1,128], index: 7, kind: input, shape index: {}]
  %s8 = inlined_call_operand.hbm [shape: f32[3,16,128], index: 8, kind: output, shape index: {}]
  %s9 = sld [smem:[#allocation0]]
  $region42: #{tpu_custom_call.1} parent=0
    _
  %s11 = ssub.s32 1, %s9
  %s12 = scalar_select 0, %s11, %s9
  $region1: #{tpu_custom_call.1} parent=0
    #allocation2 [shape = 'u8[24576]{0}', space=vmem, size = 0x6000, scoped, tag = 'output window, operand 0, single buffered']
    #allocation3 [shape = 's32[1]{0}', space=sflag, size = 0x4, scoped, tag = 'scoped memory for tpu_custom_call.1']
    %13 = vsyncpa [#allocation3], 0
    // Predicated region
    $region2: #{tpu_custom_call.1} parent=1 // pred_check
      _
    $region3: #{tpu_custom_call.1} parent=1 // pred_check_branch
      %15 = sbr.rel (0) target = $region5
    $region4: #{tpu_custom_call.1} parent=1 // pred_region
      _
    $region5: #{tpu_custom_call.1} parent=1 // pred_fallthru
      _
    // Predicated region
    $region6: #{tpu_custom_call.1} parent=1 // pred_check
      _
    $region7: #{tpu_custom_call.1} parent=1 // pred_check_branch
      %17 = sbr.rel (0) target = $region9
    $region8: #{tpu_custom_call.1} parent=1 // pred_region
      _
    $region9: #{tpu_custom_call.1} parent=1 // pred_fallthru
      _
    // Predicated region
    $region10: #{tpu_custom_call.1} parent=1 // pred_check
      _
    $region11: #{tpu_custom_call.1} parent=1 // pred_check_branch
      %19 = sbr.rel (0) target = $region13
    $region12: #{tpu_custom_call.1} parent=1 // pred_region
      _
    $region13: #{tpu_custom_call.1} parent=1 // pred_fallthru
      _
    // Predicated region
    $region14: #{tpu_custom_call.1} parent=1 // pred_check
      _
    $region15: #{tpu_custom_call.1} parent=1 // pred_check_branch
      %21 = sbr.rel (0) target = $region17
    $region16: #{tpu_custom_call.1} parent=1 // pred_region
      _
    $region17: #{tpu_custom_call.1} parent=1 // pred_fallthru
      _
    // Predicated region
    $region18: #{tpu_custom_call.1} parent=1 // pred_check
      _
    $region19: #{tpu_custom_call.1} parent=1 // pred_check_branch
      %23 = sbr.rel (0) target = $region21
    $region20: #{tpu_custom_call.1} parent=1 // pred_region
      _
    $region21: #{tpu_custom_call.1} parent=1 // pred_fallthru
      _
    // Predicated region
    $region22: #{tpu_custom_call.1} parent=1 // pred_check
      _
    $region23: #{tpu_custom_call.1} parent=1 // pred_check_branch
      %25 = sbr.rel (0) target = $region25
    $region24: #{tpu_custom_call.1} parent=1 // pred_region
      _
    $region25: #{tpu_custom_call.1} parent=1 // pred_fallthru
      _
    // Predicated region
    $region26: #{tpu_custom_call.1} parent=1 // pred_check
      _
    $region27: #{tpu_custom_call.1} parent=1 // pred_check_branch
      %27 = sbr.rel (0) target = $region29
    $region28: #{tpu_custom_call.1} parent=1 // pred_region
      _
    $region29: #{tpu_custom_call.1} parent=1 // pred_fallthru
      _
    // Predicated region
    $region30: #{tpu_custom_call.1} parent=1 // pred_check
      _
    $region31: #{tpu_custom_call.1} parent=1 // pred_check_branch
      %29 = sbr.rel (0) target = $region33
    $region32: #{tpu_custom_call.1} parent=1 // pred_region
      _
    $region33: #{tpu_custom_call.1} parent=1 // pred_fallthru
      _
    %v31 = vld [vmem:[%s0] sm:$0xff]
    %v32 = vld [vmem:[%s0 + $0x8] sm:$0xff]
    %v33 = vld [vmem:[%s0 + $0x10] sm:$0xf]
    %v34 = vld [vmem:[%s0 + $0x14] sm:$0xff]
    %v35 = vld [vmem:[%s0 + $0x1c] sm:$0xff]
    %v36 = vld [vmem:[%s0 + $0x24] sm:$0xf]
    %v37 = vld [vmem:[%s1] sm:$0xff]
    %v38 = vld [vmem:[%s1 + $0x8] sm:$0xf]
    %v39 = vld [vmem:[%s1 + $0xc] sm:$0xff]
    %v40 = vld [vmem:[%s1 + $0x14] sm:$0xf]
    %v41 = vld [vmem:[%s1 + $0x18] sm:$0xff]
    %v42 = vld [vmem:[%s1 + $0x20] sm:$0xf]
    %v43 = vld [vmem:[%s1 + $0x24] sm:$0xff]
    %v44 = vld [vmem:[%s1 + $0x2c] sm:$0xf]
    %v45 = vld [vmem:[%s1 + $0x30] sm:$0xff]
    %v46 = vld [vmem:[%s1 + $0x38] sm:$0xf]
    %v47 = vld [vmem:[%s1 + $0x3c] sm:$0xff]
    %v48 = vld [vmem:[%s1 + $0x44] sm:$0xf]
    %v49 = vld [vmem:[%s1 + $0x48] sm:$0xff]
    %v50 = vld [vmem:[%s1 + $0x50] sm:$0xf]
    %v51 = vld [vmem:[%s1 + $0x54] sm:$0xff]
    %v52 = vld [vmem:[%s1 + $0x5c] sm:$0xf]
    %v53 = vld [vmem:[%s1 + $0x60] sm:$0xff]
    %v54 = vld [vmem:[%s1 + $0x68] sm:$0xf]
    %v55 = vld [vmem:[%s1 + $0x6c] sm:$0xff]
    %v56 = vld [vmem:[%s1 + $0x74] sm:$0xf]
    %v57 = vld [vmem:[%s1 + $0x78] sm:$0xff]
    %v58 = vld [vmem:[%s1 + $0x80] sm:$0xf]
    %v59 = vld [vmem:[%s1 + $0x84] sm:$0xff]
    %v60 = vld [vmem:[%s1 + $0x8c] sm:$0xf]
    %v61 = vld [vmem:[%s1 + $0x90] sm:$0xff]
    %v62 = vld [vmem:[%s1 + $0x98] sm:$0xf]
    %v63 = vld [vmem:[%s1 + $0x9c] sm:$0xff]
    %v64 = vld [vmem:[%s1 + $0xa4] sm:$0xf]
    %v65 = vld [vmem:[%s1 + $0xa8] sm:$0xff]
    %v66 = vld [vmem:[%s1 + $0xb0] sm:$0xf]
    %v67 = vld [vmem:[%s1 + $0xb4] sm:$0xff]
    %v68 = vld [vmem:[%s1 + $0xbc] sm:$0xf]
    %v69 = vld [vmem:[%s1 + $0xc0] sm:$0xff]
    %v70 = vld [vmem:[%s1 + $0xc8] sm:$0xf]
    %v71 = vld [vmem:[%s1 + $0xcc] sm:$0xff]
    %v72 = vld [vmem:[%s1 + $0xd4] sm:$0xf]
    %v73 = vld [vmem:[%s1 + $0xd8] sm:$0xff]
    %v74 = vld [vmem:[%s1 + $0xe0] sm:$0xf]
    %v75 = vld [vmem:[%s1 + $0xe4] sm:$0xff]
    %v76 = vld [vmem:[%s1 + $0xec] sm:$0xf]
    %v77 = vld [vmem:[%s1 + $0xf0] sm:$0xff]
    %v78 = vld [vmem:[%s1 + $0xf8] sm:$0xf]
    %v79 = vld [vmem:[%s1 + $0xfc] sm:$0xff]
    %v80 = vld [vmem:[%s1 + $0x104] sm:$0xf]
    %v81 = vld [vmem:[%s1 + $0x108] sm:$0xff]
    %v82 = vld [vmem:[%s1 + $0x110] sm:$0xf]
    %v83 = vld [vmem:[%s1 + $0x114] sm:$0xff]
    %v84 = vld [vmem:[%s1 + $0x11c] sm:$0xf]
    %v85 = vld [vmem:[%s1 + $0x120] sm:$0xff]
    %v86 = vld [vmem:[%s1 + $0x128] sm:$0xf]
    %v87 = vld [vmem:[%s1 + $0x12c] sm:$0xff]
    %v88 = vld [vmem:[%s1 + $0x134] sm:$0xf]
    %v89 = vld [vmem:[%s1 + $0x138] sm:$0xff]
    %v90 = vld [vmem:[%s1 + $0x140] sm:$0xf]
    %v91 = vld [vmem:[%s1 + $0x144] sm:$0xff]
    %v92 = vld [vmem:[%s1 + $0x14c] sm:$0xf]
    %v93 = vld [vmem:[%s1 + $0x150] sm:$0xff]
    %v94 = vld [vmem:[%s1 + $0x158] sm:$0xf]
    %v95 = vld [vmem:[%s1 + $0x15c] sm:$0xff]
    %v96 = vld [vmem:[%s1 + $0x164] sm:$0xf]
    %v97 = vld [vmem:[%s1 + $0x168] sm:$0xff]
    %v98 = vld [vmem:[%s1 + $0x170] sm:$0xf]
    %v99 = vld [vmem:[%s1 + $0x174] sm:$0xff]
    %v100 = vld [vmem:[%s1 + $0x17c] sm:$0xf]
    %v101 = vld [vmem:[%s1 + $0x180] sm:$0xff]
    %v102 = vld [vmem:[%s1 + $0x188] sm:$0xf]
    %v103 = vld [vmem:[%s1 + $0x18c] sm:$0xff]
    %v104 = vld [vmem:[%s1 + $0x194] sm:$0xf]
    %v105 = vld [vmem:[%s1 + $0x198] sm:$0xff]
    %v106 = vld [vmem:[%s1 + $0x1a0] sm:$0xf]
    %v107 = vld [vmem:[%s1 + $0x1a4] sm:$0xff]
    %v108 = vld [vmem:[%s1 + $0x1ac] sm:$0xf]
    %v109 = vld [vmem:[%s1 + $0x1b0] sm:$0xff]
    %v110 = vld [vmem:[%s1 + $0x1b8] sm:$0xf]
    %v111 = vld [vmem:[%s1 + $0x1bc] sm:$0xff]
    %v112 = vld [vmem:[%s1 + $0x1c4] sm:$0xf]
    %v113 = vld [vmem:[%s1 + $0x1c8] sm:$0xff]
    %v114 = vld [vmem:[%s1 + $0x1d0] sm:$0xf]
    %v115 = vld [vmem:[%s1 + $0x1d4] sm:$0xff]
    %v116 = vld [vmem:[%s1 + $0x1dc] sm:$0xf]
    %v117 = vld [vmem:[%s1 + $0x1e0] sm:$0xff]
    %v118 = vld [vmem:[%s1 + $0x1e8] sm:$0xf]
    %v119 = vld [vmem:[%s1 + $0x1ec] sm:$0xff]
    %v120 = vld [vmem:[%s1 + $0x1f4] sm:$0xf]
    %v121 = vld [vmem:[%s1 + $0x1f8] sm:$0xff]
    %v122 = vld [vmem:[%s1 + $0x200] sm:$0xf]
    %v123 = vld [vmem:[%s1 + $0x204] sm:$0xff]
    %v124 = vld [vmem:[%s1 + $0x20c] sm:$0xf]
    %v125 = vld [vmem:[%s1 + $0x210] sm:$0xff]
    %v126 = vld [vmem:[%s1 + $0x218] sm:$0xf]
    %v127 = vld [vmem:[%s1 + $0x21c] sm:$0xff]
    %v128 = vld [vmem:[%s1 + $0x224] sm:$0xf]
    %v129 = vld [vmem:[%s1 + $0x228] sm:$0xff]
    %v130 = vld [vmem:[%s1 + $0x230] sm:$0xf]
    %v131 = vld [vmem:[%s1 + $0x234] sm:$0xff]
    %v132 = vld [vmem:[%s1 + $0x23c] sm:$0xf]
    %v133 = vld [vmem:[%s1 + $0x240] sm:$0xff]
    %v134 = vld [vmem:[%s1 + $0x248] sm:$0xf]
    %v135 = vld [vmem:[%s1 + $0x24c] sm:$0xff]
    %v136 = vld [vmem:[%s1 + $0x254] sm:$0xf]
    %v137 = vld [vmem:[%s1 + $0x258] sm:$0xff]
    %v138 = vld [vmem:[%s1 + $0x260] sm:$0xf]
    %v139 = vld [vmem:[%s1 + $0x264] sm:$0xff]
    %v140 = vld [vmem:[%s1 + $0x26c] sm:$0xf]
    %v141 = vld [vmem:[%s1 + $0x270] sm:$0xff]
    %v142 = vld [vmem:[%s1 + $0x278] sm:$0xf]
    %v143 = vld [vmem:[%s1 + $0x27c] sm:$0xff]
    %v144 = vld [vmem:[%s1 + $0x284] sm:$0xf]
    %v145 = vld [vmem:[%s1 + $0x288] sm:$0xff]
    %v146 = vld [vmem:[%s1 + $0x290] sm:$0xf]
    %v147 = vld [vmem:[%s1 + $0x294] sm:$0xff]
    %v148 = vld [vmem:[%s1 + $0x29c] sm:$0xf]
    %v149 = vld [vmem:[%s1 + $0x2a0] sm:$0xff]
    %v150 = vld [vmem:[%s1 + $0x2a8] sm:$0xf]
    %v151 = vld [vmem:[%s1 + $0x2ac] sm:$0xff]
    %v152 = vld [vmem:[%s1 + $0x2b4] sm:$0xf]
    %v153 = vld [vmem:[%s1 + $0x2b8] sm:$0xff]
    %v154 = vld [vmem:[%s1 + $0x2c0] sm:$0xf]
    %v155 = vld [vmem:[%s1 + $0x2c4] sm:$0xff]
    %v156 = vld [vmem:[%s1 + $0x2cc] sm:$0xf]
    %v157 = vld [vmem:[%s1 + $0x2d0] sm:$0xff]
    %v158 = vld [vmem:[%s1 + $0x2d8] sm:$0xf]
    %v159 = vld [vmem:[%s1 + $0x2dc] sm:$0xff]
    %v160 = vld [vmem:[%s1 + $0x2e4] sm:$0xf]
    %v161 = vld [vmem:[%s1 + $0x2e8] sm:$0xff]
    %v162 = vld [vmem:[%s1 + $0x2f0] sm:$0xf]
    %v163 = vld [vmem:[%s1 + $0x2f4] sm:$0xff]
    %v164 = vld [vmem:[%s1 + $0x2fc] sm:$0xf]
    %v165 = vld [vmem:[%s1 + $0x300] sm:$0xff]
    %v166 = vld [vmem:[%s1 + $0x308] sm:$0xf]
    %v167 = vld [vmem:[%s1 + $0x30c] sm:$0xff]
    %v168 = vld [vmem:[%s1 + $0x314] sm:$0xf]
    %v169 = vld [vmem:[%s1 + $0x318] sm:$0xff]
    %v170 = vld [vmem:[%s1 + $0x320] sm:$0xf]
    %v171 = vld [vmem:[%s1 + $0x324] sm:$0xff]
    %v172 = vld [vmem:[%s1 + $0x32c] sm:$0xf]
    %v173 = vld [vmem:[%s1 + $0x330] sm:$0xff]
    %v174 = vld [vmem:[%s1 + $0x338] sm:$0xf]
    %v175 = vld [vmem:[%s1 + $0x33c] sm:$0xff]
    %v176 = vld [vmem:[%s1 + $0x344] sm:$0xf]
    %v177 = vld [vmem:[%s1 + $0x348] sm:$0xff]
    %v178 = vld [vmem:[%s1 + $0x350] sm:$0xf]
    %v179 = vld [vmem:[%s1 + $0x354] sm:$0xff]
    %v180 = vld [vmem:[%s1 + $0x35c] sm:$0xf]
    %v181 = vld [vmem:[%s2] sm:$0xff]
    %v182 = vld [vmem:[%s2 + $0x8] sm:$0xf]
    %v183 = vld [vmem:[%s2 + $0xc] sm:$0xff]
    %v184 = vld [vmem:[%s2 + $0x14] sm:$0xf]
    %v185 = vld [vmem:[%s2 + $0x18] sm:$0xff]
    %v186 = vld [vmem:[%s2 + $0x20] sm:$0xf]
    %v187 = vld [vmem:[%s2 + $0x24] sm:$0xff]
    %v188 = vld [vmem:[%s2 + $0x2c] sm:$0xf]
    %v189 = vld [vmem:[%s2 + $0x30] sm:$0xff]
    %v190 = vld [vmem:[%s2 + $0x38] sm:$0xf]
    %v191 = vld [vmem:[%s2 + $0x3c] sm:$0xff]
    %v192 = vld [vmem:[%s2 + $0x44] sm:$0xf]
    %v193 = vld [vmem:[%s2 + $0x48] sm:$0xff]
    %v194 = vld [vmem:[%s2 + $0x50] sm:$0xf]
    %v195 = vld [vmem:[%s2 + $0x54] sm:$0xff]
    %v196 = vld [vmem:[%s2 + $0x5c] sm:$0xf]
    %v197 = vld [vmem:[%s2 + $0x60] sm:$0xff]
    %v198 = vld [vmem:[%s2 + $0x68] sm:$0xf]
    %v199 = vld [vmem:[%s2 + $0x6c] sm:$0xff]
    %v200 = vld [vmem:[%s2 + $0x74] sm:$0xf]
    %v201 = vld [vmem:[%s2 + $0x78] sm:$0xff]
    %v202 = vld [vmem:[%s2 + $0x80] sm:$0xf]
    %v203 = vld [vmem:[%s2 + $0x84] sm:$0xff]
    %v204 = vld [vmem:[%s2 + $0x8c] sm:$0xf]
    %v205 = vld [vmem:[%s2 + $0x90] sm:$0xff]
    %v206 = vld [vmem:[%s2 + $0x98] sm:$0xf]
    %v207 = vld [vmem:[%s2 + $0x9c] sm:$0xff]
    %v208 = vld [vmem:[%s2 + $0xa4] sm:$0xf]
    %v209 = vld [vmem:[%s2 + $0xa8] sm:$0xff]
    %v210 = vld [vmem:[%s2 + $0xb0] sm:$0xf]
    %v211 = vld [vmem:[%s2 + $0xb4] sm:$0xff]
    %v212 = vld [vmem:[%s2 + $0xbc] sm:$0xf]
    %v213 = vld [vmem:[%s3] sm:$0x7]
    %v214 = vld [vmem:[%s4] sm:$0xff]
    %v215 = vld [vmem:[%s4 + $0x8] sm:$0xf]
    %v216 = vld [vmem:[%s4 + $0xc] sm:$0xff]
    %v217 = vld [vmem:[%s4 + $0x14] sm:$0xf]
    %v218 = vld [vmem:[%s4 + $0x18] sm:$0xff]
    %v219 = vld [vmem:[%s4 + $0x20] sm:$0xf]
    %v220 = vld [vmem:[%s4 + $0x24] sm:$0xff]
    %v221 = vld [vmem:[%s4 + $0x2c] sm:$0xf]
    %v222 = vld [vmem:[%s4 + $0x30] sm:$0xff]
    %v223 = vld [vmem:[%s4 + $0x38] sm:$0xf]
    %v224 = vld [vmem:[%s4 + $0x3c] sm:$0xff]
    %v225 = vld [vmem:[%s4 + $0x44] sm:$0xf]
    %v226 = vld [vmem:[%s4 + $0x48] sm:$0xff]
    %v227 = vld [vmem:[%s4 + $0x50] sm:$0xf]
    %v228 = vld [vmem:[%s4 + $0x54] sm:$0xff]
    %v229 = vld [vmem:[%s4 + $0x5c] sm:$0xf]
    %v230 = vld [vmem:[%s4 + $0x60] sm:$0xff]
    %v231 = vld [vmem:[%s4 + $0x68] sm:$0xf]
    %v232 = vld [vmem:[%s4 + $0x6c] sm:$0xff]
    %v233 = vld [vmem:[%s4 + $0x74] sm:$0xf]
    %v234 = vld [vmem:[%s4 + $0x78] sm:$0xff]
    %v235 = vld [vmem:[%s4 + $0x80] sm:$0xf]
    %v236 = vld [vmem:[%s4 + $0x84] sm:$0xff]
    %v237 = vld [vmem:[%s4 + $0x8c] sm:$0xf]
    %v238 = vld [vmem:[%s4 + $0x90] sm:$0xff]
    %v239 = vld [vmem:[%s4 + $0x98] sm:$0xf]
    %v240 = vld [vmem:[%s4 + $0x9c] sm:$0xff]
    %v241 = vld [vmem:[%s4 + $0xa4] sm:$0xf]
    %v242 = vld [vmem:[%s4 + $0xa8] sm:$0xff]
    %v243 = vld [vmem:[%s4 + $0xb0] sm:$0xf]
    %v244 = vld [vmem:[%s4 + $0xb4] sm:$0xff]
    %v245 = vld [vmem:[%s4 + $0xbc] sm:$0xf]
    %v246 = vld [vmem:[%s4 + $0xc0] sm:$0xff]
    %v247 = vld [vmem:[%s4 + $0xc8] sm:$0xf]
    %v248 = vld [vmem:[%s4 + $0xcc] sm:$0xff]
    %v249 = vld [vmem:[%s4 + $0xd4] sm:$0xf]
    %v250 = vld [vmem:[%s4 + $0xd8] sm:$0xff]
    %v251 = vld [vmem:[%s4 + $0xe0] sm:$0xf]
    %v252 = vld [vmem:[%s4 + $0xe4] sm:$0xff]
    %v253 = vld [vmem:[%s4 + $0xec] sm:$0xf]
    %v254 = vld [vmem:[%s4 + $0xf0] sm:$0xff]
    %v255 = vld [vmem:[%s4 + $0xf8] sm:$0xf]
    %v256 = vld [vmem:[%s4 + $0xfc] sm:$0xff]
    %v257 = vld [vmem:[%s4 + $0x104] sm:$0xf]
    %v258 = vld [vmem:[%s4 + $0x108] sm:$0xff]
    %v259 = vld [vmem:[%s4 + $0x110] sm:$0xf]
    %v260 = vld [vmem:[%s4 + $0x114] sm:$0xff]
    %v261 = vld [vmem:[%s4 + $0x11c] sm:$0xf]
    %v262 = vld [vmem:[%s4 + $0x120] sm:$0xff]
    %v263 = vld [vmem:[%s4 + $0x128] sm:$0xf]
    %v264 = vld [vmem:[%s4 + $0x12c] sm:$0xff]
    %v265 = vld [vmem:[%s4 + $0x134] sm:$0xf]
    %v266 = vld [vmem:[%s4 + $0x138] sm:$0xff]
    %v267 = vld [vmem:[%s4 + $0x140] sm:$0xf]
    %v268 = vld [vmem:[%s4 + $0x144] sm:$0xff]
    %v269 = vld [vmem:[%s4 + $0x14c] sm:$0xf]
    %v270 = vld [vmem:[%s4 + $0x150] sm:$0xff]
    %v271 = vld [vmem:[%s4 + $0x158] sm:$0xf]
    %v272 = vld [vmem:[%s4 + $0x15c] sm:$0xff]
    %v273 = vld [vmem:[%s4 + $0x164] sm:$0xf]
    %v274 = vld [vmem:[%s4 + $0x168] sm:$0xff]
    %v275 = vld [vmem:[%s4 + $0x170] sm:$0xf]
    %v276 = vld [vmem:[%s4 + $0x174] sm:$0xff]
    %v277 = vld [vmem:[%s4 + $0x17c] sm:$0xf]
    %v278 = vld [vmem:[%s4 + $0x180] sm:$0xff]
    %v279 = vld [vmem:[%s4 + $0x188] sm:$0xf]
    %v280 = vld [vmem:[%s4 + $0x18c] sm:$0xff]
    %v281 = vld [vmem:[%s4 + $0x194] sm:$0xf]
    %v282 = vld [vmem:[%s4 + $0x198] sm:$0xff]
    %v283 = vld [vmem:[%s4 + $0x1a0] sm:$0xf]
    %v284 = vld [vmem:[%s4 + $0x1a4] sm:$0xff]
    %v285 = vld [vmem:[%s4 + $0x1ac] sm:$0xf]
    %v286 = vld [vmem:[%s5] sm:$0x7]
    %v287 = vld [vmem:[%s6] sm:$0xf]
    %v288 = vld [vmem:[%s6 + $0x4] sm:$0xf]
    %v289 = vld [vmem:[%s6 + $0x8] sm:$0xf]
    %v290 = vld [vmem:[%s6 + $0xc] sm:$0xf]
    %v291 = vld [vmem:[%s6 + $0x10] sm:$0xf]
    %v292 = vld [vmem:[%s6 + $0x14] sm:$0xf]
    %v293 = vld [vmem:[%s6 + $0x18] sm:$0xf]
    %v294 = vld [vmem:[%s6 + $0x1c] sm:$0xf]
    %v295 = vld [vmem:[%s6 + $0x20] sm:$0xf]
    %v296 = vld [vmem:[%s6 + $0x24] sm:$0xf]
    %v297 = vld [vmem:[%s6 + $0x28] sm:$0xf]
    %v298 = vld [vmem:[%s6 + $0x2c] sm:$0xf]
    %v299 = vld [vmem:[%s6 + $0x30] sm:$0xf]
    %v300 = vld [vmem:[%s6 + $0x34] sm:$0xf]
    %v301 = vld [vmem:[%s6 + $0x38] sm:$0xf]
    %v302 = vld [vmem:[%s6 + $0x3c] sm:$0xf]
    %v303 = vld [vmem:[%s6 + $0x40] sm:$0xf]
    %v304 = vld [vmem:[%s6 + $0x44] sm:$0xf]
    %v305 = vld [vmem:[%s6 + $0x48] sm:$0xf]
    %v306 = vld [vmem:[%s6 + $0x4c] sm:$0xf]
    %v307 = vld [vmem:[%s6 + $0x50] sm:$0xf]
    %v308 = vld [vmem:[%s6 + $0x54] sm:$0xf]
    %v309 = vld [vmem:[%s6 + $0x58] sm:$0xf]
    %v310 = vld [vmem:[%s6 + $0x5c] sm:$0xf]
    %v311 = vld [vmem:[%s6 + $0x60] sm:$0xf]
    %v312 = vld [vmem:[%s6 + $0x64] sm:$0xf]
    %v313 = vld [vmem:[%s6 + $0x68] sm:$0xf]
    %v314 = vld [vmem:[%s6 + $0x6c] sm:$0xf]
    %v315 = vld [vmem:[%s6 + $0x70] sm:$0xf]
    %v316 = vld [vmem:[%s6 + $0x74] sm:$0xf]
    %v317 = vld [vmem:[%s6 + $0x78] sm:$0xf]
    %v318 = vld [vmem:[%s6 + $0x7c] sm:$0xf]
    %v319 = vld [vmem:[%s6 + $0x80] sm:$0xf]
    %v320 = vld [vmem:[%s6 + $0x84] sm:$0xf]
    %v321 = vld [vmem:[%s6 + $0x88] sm:$0xf]
    %v322 = vld [vmem:[%s6 + $0x8c] sm:$0xf]
    %v323 = vld [vmem:[%s7] sm:$0x1]
    %v325 = vlaneseq
    %v326 = vshrl.u32 %v325, 7
    %v327 = vsub.s32 0, %v326
    %v328 = vrot.slane %v213, %v327
    %v329 = vlaneseq
    %v330 = vshrl.u32 %v329, 7
    %v331 = vsub.s32 1, %v330
    %v332 = vrot.slane %v213, %v331
    %v333 = vlaneseq
    %v334 = vshrl.u32 %v333, 7
    %v335 = vsub.s32 2, %v334
    %v336 = vrot.slane %v213, %v335
    %v346 = vunpack.c.l.b16 %v31
    %v347 = vunpack.c.h.b16 %v31
    %v348 = vunpack.c.l.b16 %v32
    %v349 = vunpack.c.h.b16 %v32
    %v350 = vunpack.c.l.b16 %v33
    %v351 = vunpack.c.l.b16 %v34
    %v352 = vunpack.c.h.b16 %v34
    %v353 = vunpack.c.l.b16 %v35
    %v354 = vunpack.c.h.b16 %v35
    %v355 = vunpack.c.l.b16 %v36
    %v356 = vpack.c.b16 %v351, %v346
    %v357 = vpack.c.b16 %v352, %v347
    %v358 = vpack.c.b16 %v353, %v348
    %v359 = vpack.c.b16 %v354, %v349
    %v360 = vpack.c.b16 %v355, %v350
    %v509 = vunpack.c.l.b16 %v37
    %v510 = vunpack.c.h.b16 %v37
    %v511 = vunpack.c.l.b16 %v38
    %v512 = vunpack.c.l.b16 %v39
    %v513 = vunpack.c.h.b16 %v39
    %v514 = vunpack.c.l.b16 %v40
    %v515 = vunpack.c.l.b16 %v41
    %v516 = vunpack.c.h.b16 %v41
    %v517 = vunpack.c.l.b16 %v42
    %v518 = vunpack.c.l.b16 %v43
    %v519 = vunpack.c.h.b16 %v43
    %v520 = vunpack.c.l.b16 %v44
    %v521 = vunpack.c.l.b16 %v45
    %v522 = vunpack.c.h.b16 %v45
    %v523 = vunpack.c.l.b16 %v46
    %v524 = vunpack.c.l.b16 %v47
    %v525 = vunpack.c.h.b16 %v47
    %v526 = vunpack.c.l.b16 %v48
    %v527 = vunpack.c.l.b16 %v49
    %v528 = vunpack.c.h.b16 %v49
    %v529 = vunpack.c.l.b16 %v50
    %v530 = vunpack.c.l.b16 %v51
    %v531 = vunpack.c.h.b16 %v51
    %v532 = vunpack.c.l.b16 %v52
    %v533 = vunpack.c.l.b16 %v53
    %v534 = vunpack.c.h.b16 %v53
    %v535 = vunpack.c.l.b16 %v54
    %v536 = vunpack.c.l.b16 %v55
    %v537 = vunpack.c.h.b16 %v55
    %v538 = vunpack.c.l.b16 %v56
    %v539 = vunpack.c.l.b16 %v57
    %v540 = vunpack.c.h.b16 %v57
    %v541 = vunpack.c.l.b16 %v58
    %v542 = vunpack.c.l.b16 %v59
    %v543 = vunpack.c.h.b16 %v59
    %v544 = vunpack.c.l.b16 %v60
    %v545 = vunpack.c.l.b16 %v61
    %v546 = vunpack.c.h.b16 %v61
    %v547 = vunpack.c.l.b16 %v62
    %v548 = vunpack.c.l.b16 %v63
    %v549 = vunpack.c.h.b16 %v63
    %v550 = vunpack.c.l.b16 %v64
    %v551 = vunpack.c.l.b16 %v65
    %v552 = vunpack.c.h.b16 %v65
    %v553 = vunpack.c.l.b16 %v66
    %v554 = vunpack.c.l.b16 %v67
    %v555 = vunpack.c.h.b16 %v67
    %v556 = vunpack.c.l.b16 %v68
    %v557 = vunpack.c.l.b16 %v69
    %v558 = vunpack.c.h.b16 %v69
    %v559 = vunpack.c.l.b16 %v70
    %v560 = vunpack.c.l.b16 %v71
    %v561 = vunpack.c.h.b16 %v71
    %v562 = vunpack.c.l.b16 %v72
    %v563 = vunpack.c.l.b16 %v73
    %v564 = vunpack.c.h.b16 %v73
    %v565 = vunpack.c.l.b16 %v74
    %v566 = vunpack.c.l.b16 %v75
    %v567 = vunpack.c.h.b16 %v75
    %v568 = vunpack.c.l.b16 %v76
    %v569 = vunpack.c.l.b16 %v77
    %v570 = vunpack.c.h.b16 %v77
    %v571 = vunpack.c.l.b16 %v78
    %v572 = vunpack.c.l.b16 %v79
    %v573 = vunpack.c.h.b16 %v79
    %v574 = vunpack.c.l.b16 %v80
    %v575 = vunpack.c.l.b16 %v81
    %v576 = vunpack.c.h.b16 %v81
    %v577 = vunpack.c.l.b16 %v82
    %v578 = vunpack.c.l.b16 %v83
    %v579 = vunpack.c.h.b16 %v83
    %v580 = vunpack.c.l.b16 %v84
    %v581 = vunpack.c.l.b16 %v85
    %v582 = vunpack.c.h.b16 %v85
    %v583 = vunpack.c.l.b16 %v86
    %v584 = vunpack.c.l.b16 %v87
    %v585 = vunpack.c.h.b16 %v87
    %v586 = vunpack.c.l.b16 %v88
    %v587 = vunpack.c.l.b16 %v89
    %v588 = vunpack.c.h.b16 %v89
    %v589 = vunpack.c.l.b16 %v90
    %v590 = vunpack.c.l.b16 %v91
    %v591 = vunpack.c.h.b16 %v91
    %v592 = vunpack.c.l.b16 %v92
    %v593 = vunpack.c.l.b16 %v93
    %v594 = vunpack.c.h.b16 %v93
    %v595 = vunpack.c.l.b16 %v94
    %v596 = vunpack.c.l.b16 %v95
    %v597 = vunpack.c.h.b16 %v95
    %v598 = vunpack.c.l.b16 %v96
    %v599 = vunpack.c.l.b16 %v97
    %v600 = vunpack.c.h.b16 %v97
    %v601 = vunpack.c.l.b16 %v98
    %v602 = vunpack.c.l.b16 %v99
    %v603 = vunpack.c.h.b16 %v99
    %v604 = vunpack.c.l.b16 %v100
    %v605 = vunpack.c.l.b16 %v101
    %v606 = vunpack.c.h.b16 %v101
    %v607 = vunpack.c.l.b16 %v102
    %v608 = vunpack.c.l.b16 %v103
    %v609 = vunpack.c.h.b16 %v103
    %v610 = vunpack.c.l.b16 %v104
    %v611 = vunpack.c.l.b16 %v105
    %v612 = vunpack.c.h.b16 %v105
    %v613 = vunpack.c.l.b16 %v106
    %v614 = vunpack.c.l.b16 %v107
    %v615 = vunpack.c.h.b16 %v107
    %v616 = vunpack.c.l.b16 %v108
    %v617 = vunpack.c.l.b16 %v109
    %v618 = vunpack.c.h.b16 %v109
    %v619 = vunpack.c.l.b16 %v110
    %v620 = vunpack.c.l.b16 %v111
    %v621 = vunpack.c.h.b16 %v111
    %v622 = vunpack.c.l.b16 %v112
    %v623 = vunpack.c.l.b16 %v113
    %v624 = vunpack.c.h.b16 %v113
    %v625 = vunpack.c.l.b16 %v114
    %v626 = vunpack.c.l.b16 %v115
    %v627 = vunpack.c.h.b16 %v115
    %v628 = vunpack.c.l.b16 %v116
    %v629 = vunpack.c.l.b16 %v117
    %v630 = vunpack.c.h.b16 %v117
    %v631 = vunpack.c.l.b16 %v118
    %v632 = vunpack.c.l.b16 %v119
    %v633 = vunpack.c.h.b16 %v119
    %v634 = vunpack.c.l.b16 %v120
    %v635 = vunpack.c.l.b16 %v121
    %v636 = vunpack.c.h.b16 %v121
    %v637 = vunpack.c.l.b16 %v122
    %v638 = vunpack.c.l.b16 %v123
    %v639 = vunpack.c.h.b16 %v123
    %v640 = vunpack.c.l.b16 %v124
    %v641 = vunpack.c.l.b16 %v125
    %v642 = vunpack.c.h.b16 %v125
    %v643 = vunpack.c.l.b16 %v126
    %v644 = vunpack.c.l.b16 %v127
    %v645 = vunpack.c.h.b16 %v127
    %v646 = vunpack.c.l.b16 %v128
    %v647 = vunpack.c.l.b16 %v129
    %v648 = vunpack.c.h.b16 %v129
    %v649 = vunpack.c.l.b16 %v130
    %v650 = vunpack.c.l.b16 %v131
    %v651 = vunpack.c.h.b16 %v131
    %v652 = vunpack.c.l.b16 %v132
    %v653 = vunpack.c.l.b16 %v133
    %v654 = vunpack.c.h.b16 %v133
    %v655 = vunpack.c.l.b16 %v134
    %v656 = vunpack.c.l.b16 %v135
    %v657 = vunpack.c.h.b16 %v135
    %v658 = vunpack.c.l.b16 %v136
    %v659 = vunpack.c.l.b16 %v137
    %v660 = vunpack.c.h.b16 %v137
    %v661 = vunpack.c.l.b16 %v138
    %v662 = vunpack.c.l.b16 %v139
    %v663 = vunpack.c.h.b16 %v139
    %v664 = vunpack.c.l.b16 %v140
    %v665 = vunpack.c.l.b16 %v141
    %v666 = vunpack.c.h.b16 %v141
    %v667 = vunpack.c.l.b16 %v142
    %v668 = vunpack.c.l.b16 %v143
    %v669 = vunpack.c.h.b16 %v143
    %v670 = vunpack.c.l.b16 %v144
    %v671 = vunpack.c.l.b16 %v145
    %v672 = vunpack.c.h.b16 %v145
    %v673 = vunpack.c.l.b16 %v146
    %v674 = vunpack.c.l.b16 %v147
    %v675 = vunpack.c.h.b16 %v147
    %v676 = vunpack.c.l.b16 %v148
    %v677 = vunpack.c.l.b16 %v149
    %v678 = vunpack.c.h.b16 %v149
    %v679 = vunpack.c.l.b16 %v150
    %v680 = vunpack.c.l.b16 %v151
    %v681 = vunpack.c.h.b16 %v151
    %v682 = vunpack.c.l.b16 %v152
    %v683 = vunpack.c.l.b16 %v153
    %v684 = vunpack.c.h.b16 %v153
    %v685 = vunpack.c.l.b16 %v154
    %v686 = vunpack.c.l.b16 %v155
    %v687 = vunpack.c.h.b16 %v155
    %v688 = vunpack.c.l.b16 %v156
    %v689 = vunpack.c.l.b16 %v157
    %v690 = vunpack.c.h.b16 %v157
    %v691 = vunpack.c.l.b16 %v158
    %v692 = vunpack.c.l.b16 %v159
    %v693 = vunpack.c.h.b16 %v159
    %v694 = vunpack.c.l.b16 %v160
    %v695 = vunpack.c.l.b16 %v161
    %v696 = vunpack.c.h.b16 %v161
    %v697 = vunpack.c.l.b16 %v162
    %v698 = vunpack.c.l.b16 %v163
    %v699 = vunpack.c.h.b16 %v163
    %v700 = vunpack.c.l.b16 %v164
    %v701 = vunpack.c.l.b16 %v165
    %v702 = vunpack.c.h.b16 %v165
    %v703 = vunpack.c.l.b16 %v166
    %v704 = vunpack.c.l.b16 %v167
    %v705 = vunpack.c.h.b16 %v167
    %v706 = vunpack.c.l.b16 %v168
    %v707 = vunpack.c.l.b16 %v169
    %v708 = vunpack.c.h.b16 %v169
    %v709 = vunpack.c.l.b16 %v170
    %v710 = vunpack.c.l.b16 %v171
    %v711 = vunpack.c.h.b16 %v171
    %v712 = vunpack.c.l.b16 %v172
    %v713 = vunpack.c.l.b16 %v173
    %v714 = vunpack.c.h.b16 %v173
    %v715 = vunpack.c.l.b16 %v174
    %v716 = vunpack.c.l.b16 %v175
    %v717 = vunpack.c.h.b16 %v175
    %v718 = vunpack.c.l.b16 %v176
    %v719 = vunpack.c.l.b16 %v177
    %v720 = vunpack.c.h.b16 %v177
    %v721 = vunpack.c.l.b16 %v178
    %v722 = vunpack.c.l.b16 %v179
    %v723 = vunpack.c.h.b16 %v179
    %v724 = vunpack.c.l.b16 %v180
    %v725 = vpack.c.b16 %v512, %v509
    %v726 = vpack.c.b16 %v513, %v510
    %v727 = vpack.c.b16 %v514, %v511
    %v728 = vpack.c.b16 %v518, %v515
    %v729 = vpack.c.b16 %v519, %v516
    %v730 = vpack.c.b16 %v520, %v517
    %v731 = vpack.c.b16 %v524, %v521
    %v732 = vpack.c.b16 %v525, %v522
    %v733 = vpack.c.b16 %v526, %v523
    %v734 = vpack.c.b16 %v530, %v527
    %v735 = vpack.c.b16 %v531, %v528
    %v736 = vpack.c.b16 %v532, %v529
    %v737 = vpack.c.b16 %v536, %v533
    %v738 = vpack.c.b16 %v537, %v534
    %v739 = vpack.c.b16 %v538, %v535
    %v740 = vpack.c.b16 %v542, %v539
    %v741 = vpack.c.b16 %v543, %v540
    %v742 = vpack.c.b16 %v544, %v541
    %v743 = vpack.c.b16 %v548, %v545
    %v744 = vpack.c.b16 %v549, %v546
    %v745 = vpack.c.b16 %v550, %v547
    %v746 = vpack.c.b16 %v554, %v551
    %v747 = vpack.c.b16 %v555, %v552
    %v748 = vpack.c.b16 %v556, %v553
    %v749 = vpack.c.b16 %v560, %v557
    %v750 = vpack.c.b16 %v561, %v558
    %v751 = vpack.c.b16 %v562, %v559
    %v752 = vpack.c.b16 %v566, %v563
    %v753 = vpack.c.b16 %v567, %v564
    %v754 = vpack.c.b16 %v568, %v565
    %v755 = vpack.c.b16 %v572, %v569
    %v756 = vpack.c.b16 %v573, %v570
    %v757 = vpack.c.b16 %v574, %v571
    %v758 = vpack.c.b16 %v578, %v575
    %v759 = vpack.c.b16 %v579, %v576
    %v760 = vpack.c.b16 %v580, %v577
    %v761 = vpack.c.b16 %v584, %v581
    %v762 = vpack.c.b16 %v585, %v582
    %v763 = vpack.c.b16 %v586, %v583
    %v764 = vpack.c.b16 %v590, %v587
    %v765 = vpack.c.b16 %v591, %v588
    %v766 = vpack.c.b16 %v592, %v589
    %v767 = vpack.c.b16 %v596, %v593
    %v768 = vpack.c.b16 %v597, %v594
    %v769 = vpack.c.b16 %v598, %v595
    %v770 = vpack.c.b16 %v602, %v599
    %v771 = vpack.c.b16 %v603, %v600
    %v772 = vpack.c.b16 %v604, %v601
    %v773 = vpack.c.b16 %v608, %v605
    %v774 = vpack.c.b16 %v609, %v606
    %v775 = vpack.c.b16 %v610, %v607
    %v776 = vpack.c.b16 %v614, %v611
    %v777 = vpack.c.b16 %v615, %v612
    %v778 = vpack.c.b16 %v616, %v613
    %v779 = vpack.c.b16 %v620, %v617
    %v780 = vpack.c.b16 %v621, %v618
    %v781 = vpack.c.b16 %v622, %v619
    %v782 = vpack.c.b16 %v626, %v623
    %v783 = vpack.c.b16 %v627, %v624
    %v784 = vpack.c.b16 %v628, %v625
    %v785 = vpack.c.b16 %v632, %v629
    %v786 = vpack.c.b16 %v633, %v630
    %v787 = vpack.c.b16 %v634, %v631
    %v788 = vpack.c.b16 %v638, %v635
    %v789 = vpack.c.b16 %v639, %v636
    %v790 = vpack.c.b16 %v640, %v637
    %v791 = vpack.c.b16 %v644, %v641
    %v792 = vpack.c.b16 %v645, %v642
    %v793 = vpack.c.b16 %v646, %v643
    %v794 = vpack.c.b16 %v650, %v647
    %v795 = vpack.c.b16 %v651, %v648
    %v796 = vpack.c.b16 %v652, %v649
    %v797 = vpack.c.b16 %v656, %v653
    %v798 = vpack.c.b16 %v657, %v654
    %v799 = vpack.c.b16 %v658, %v655
    %v800 = vpack.c.b16 %v662, %v659
    %v801 = vpack.c.b16 %v663, %v660
    %v802 = vpack.c.b16 %v664, %v661
    %v803 = vpack.c.b16 %v668, %v665
    %v804 = vpack.c.b16 %v669, %v666
    %v805 = vpack.c.b16 %v670, %v667
    %v806 = vpack.c.b16 %v674, %v671
    %v807 = vpack.c.b16 %v675, %v672
    %v808 = vpack.c.b16 %v676, %v673
    %v809 = vpack.c.b16 %v680, %v677
    %v810 = vpack.c.b16 %v681, %v678
    %v811 = vpack.c.b16 %v682, %v679
    %v812 = vpack.c.b16 %v686, %v683
    %v813 = vpack.c.b16 %v687, %v684
    %v814 = vpack.c.b16 %v688, %v685
    %v815 = vpack.c.b16 %v692, %v689
    %v816 = vpack.c.b16 %v693, %v690
    %v817 = vpack.c.b16 %v694, %v691
    %v818 = vpack.c.b16 %v698, %v695
    %v819 = vpack.c.b16 %v699, %v696
    %v820 = vpack.c.b16 %v700, %v697
    %v821 = vpack.c.b16 %v704, %v701
    %v822 = vpack.c.b16 %v705, %v702
    %v823 = vpack.c.b16 %v706, %v703
    %v824 = vpack.c.b16 %v710, %v707
    %v825 = vpack.c.b16 %v711, %v708
    %v826 = vpack.c.b16 %v712, %v709
    %v827 = vpack.c.b16 %v716, %v713
    %v828 = vpack.c.b16 %v717, %v714
    %v829 = vpack.c.b16 %v718, %v715
    %v830 = vpack.c.b16 %v722, %v719
    %v831 = vpack.c.b16 %v723, %v720
    %v832 = vpack.c.b16 %v724, %v721
    %vm941 = vcmask 523264
    %v943 = vsel %vm941, %v360, 0
    %945 = vmatprep.subr.bf16.mxu0 %v726
    %946 = vmatpush1.bf16.msra.mxu0 %v725
    %947 = vmatprep.subr.bf16.mxu0 %v729
    %948 = vmatpush1.bf16.msra.mxu0 %v728
    %949 = vmatprep.subr.bf16.mxu0 %v732
    %950 = vmatpush1.bf16.msra.mxu0 %v731
    %951 = vmatprep.subr.bf16.mxu0 %v735
    %952 = vmatpush1.bf16.msra.mxu0 %v734
    %953 = vmatprep.subr.bf16.mxu0 %v738
    %954 = vmatpush1.bf16.msra.mxu0 %v737
    %955 = vmatprep.subr.bf16.mxu0 %v741
    %956 = vmatpush1.bf16.msra.mxu0 %v740
    %957 = vmatprep.subr.bf16.mxu0 %v744
    %958 = vmatpush1.bf16.msra.mxu0 %v743
    %959 = vmatprep.subr.bf16.mxu0 %v747
    %960 = vmatpush1.bf16.msra.mxu0 %v746
    %961 = vmatprep.subr.bf16.mxu0 %v750
    %962 = vmatpush1.bf16.msra.mxu0 %v749
    %963 = vmatprep.subr.bf16.mxu0 %v753
    %964 = vmatpush1.bf16.msra.mxu0 %v752
    %965 = vmatprep.subr.bf16.mxu0 %v756
    %966 = vmatpush1.bf16.msra.mxu0 %v755
    %967 = vmatprep.subr.bf16.mxu0 %v759
    %968 = vmatpush1.bf16.msra.mxu0 %v758
    %969 = vmatprep.subr.bf16.mxu0 %v762
    %970 = vmatpush1.bf16.msra.mxu0 %v761
    %971 = vmatprep.subr.bf16.mxu0 %v765
    %972 = vmatpush1.bf16.msra.mxu0 %v764
    %973 = vmatprep.subr.bf16.mxu0 %v768
    %974 = vmatpush1.bf16.msra.mxu0 %v767
    %975 = vmatprep.subr.bf16.mxu0 %v771
    %976 = vmatpush1.bf16.msra.mxu0 %v770
    %977 = vmatprep.mubr.bf16.mxu0 %v357
    %978 = vmatmul.mubr.bf16.gmra.mrb[0].mxu0 %v356
    %v979 = vpop.f32.mrb[0].mxu0
    %v980 = vadd.f32 %v328, %v979
    %v981 = vpop.f32.mrb[0].mxu0
    %v982 = vadd.f32 %v332, %v981
    %v983 = vpop.f32.mrb[0].mxu0
    %v984 = vadd.f32 %v328, %v983
    %v985 = vpop.f32.mrb[0].mxu0
    %v986 = vadd.f32 %v332, %v985
    %987 = vdwg.mxu0
    %988 = vmatprep.subr.bf16.mxu0 %v774
    %989 = vmatpush1.bf16.msra.mxu0 %v773
    %990 = vmatprep.subr.bf16.mxu0 %v777
    %991 = vmatpush1.bf16.msra.mxu0 %v776
    %992 = vmatprep.subr.bf16.mxu0 %v780
    %993 = vmatpush1.bf16.msra.mxu0 %v779
    %994 = vmatprep.subr.bf16.mxu0 %v783
    %995 = vmatpush1.bf16.msra.mxu0 %v782
    %996 = vmatprep.subr.bf16.mxu0 %v786
    %997 = vmatpush1.bf16.msra.mxu0 %v785
    %998 = vmatprep.subr.bf16.mxu0 %v789
    %999 = vmatpush1.bf16.msra.mxu0 %v788
    %1000 = vmatprep.subr.bf16.mxu0 %v792
    %1001 = vmatpush1.bf16.msra.mxu0 %v791
    %1002 = vmatprep.subr.bf16.mxu0 %v795
    %1003 = vmatpush1.bf16.msra.mxu0 %v794
    %1004 = vmatprep.subr.bf16.mxu0 %v798
    %1005 = vmatpush1.bf16.msra.mxu0 %v797
    %1006 = vmatprep.subr.bf16.mxu0 %v801
    %1007 = vmatpush1.bf16.msra.mxu0 %v800
    %1008 = vmatprep.subr.bf16.mxu0 %v804
    %1009 = vmatpush1.bf16.msra.mxu0 %v803
    %1010 = vmatprep.subr.bf16.mxu0 %v807
    %1011 = vmatpush1.bf16.msra.mxu0 %v806
    %1012 = vmatprep.subr.bf16.mxu0 %v810
    %1013 = vmatpush1.bf16.msra.mxu0 %v809
    %1014 = vmatprep.subr.bf16.mxu0 %v813
    %1015 = vmatpush1.bf16.msra.mxu0 %v812
    %1016 = vmatprep.subr.bf16.mxu0 %v816
    %1017 = vmatpush1.bf16.msra.mxu0 %v815
    %1018 = vmatprep.subr.bf16.mxu0 %v819
    %1019 = vmatpush1.bf16.msra.mxu0 %v818
    %1020 = vmatprep.mubr.bf16.mxu0 %v359
    %1021 = vmatmul.mubr.bf16.gmra.mrb[0].mxu0 %v358
    %v1022 = vpop.f32.mrb[0].mxu0
    %v1023 = vadd.f32 %v980, %v1022
    %v1024 = vpop.f32.mrb[0].mxu0
    %v1025 = vadd.f32 %v982, %v1024
    %v1026 = vpop.f32.mrb[0].mxu0
    %v1027 = vadd.f32 %v984, %v1026
    %v1028 = vpop.f32.mrb[0].mxu0
    %v1029 = vadd.f32 %v986, %v1028
    %1030 = vdwg.mxu0
    %1031 = vmatprep.subr.bf16.mxu0 %v822
    %1032 = vmatpush1.bf16.msra.mxu0 %v821
    %1033 = vmatprep.subr.bf16.mxu0 %v825
    %1034 = vmatpush1.bf16.msra.mxu0 %v824
    %1035 = vmatprep.subr.bf16.mxu0 %v828
    %1036 = vmatpush1.bf16.msra.mxu0 %v827
    %1037 = vmatprep.subr.bf16.mxu0 %v831
    %1038 = vmatpush1.bf16.msra.mxu0 %v830
    %1039 = vmatprep.subr.bf16.mxu0 0
    %1040 = vmatpush1.bf16.msra.mxu0 0
    %1041 = vmatprep.subr.bf16.mxu0 0
    %1042 = vmatpush1.bf16.msra.mxu0 0
    %1043 = vmatprep.subr.bf16.mxu0 0
    %1044 = vmatpush1.bf16.msra.mxu0 0
    %1045 = vmatprep.subr.bf16.mxu0 0
    %1046 = vmatpush1.bf16.msra.mxu0 0
    %1047 = vmatprep.subr.bf16.mxu0 0
    %1048 = vmatpush1.bf16.msra.mxu0 0
    %1049 = vmatprep.subr.bf16.mxu0 0
    %1050 = vmatpush1.bf16.msra.mxu0 0
    %1051 = vmatprep.subr.bf16.mxu0 0
    %1052 = vmatpush1.bf16.msra.mxu0 0
    %1053 = vmatprep.subr.bf16.mxu0 0
    %1054 = vmatpush1.bf16.msra.mxu0 0
    %1055 = vmatprep.subr.bf16.mxu0 0
    %1056 = vmatpush1.bf16.msra.mxu0 0
    %1057 = vmatprep.subr.bf16.mxu0 0
    %1058 = vmatpush1.bf16.msra.mxu0 0
    %1059 = vmatprep.subr.bf16.mxu0 0
    %1060 = vmatpush1.bf16.msra.mxu0 0
    %1061 = vmatprep.subr.bf16.mxu0 0
    %1062 = vmatpush1.bf16.msra.mxu0 0
    %1063 = vmatprep.mubr.bf16.mxu0 0
    %1064 = vmatmul.mubr.bf16.gmra.mrb[0].mxu0 %v943
    %v1065 = vpop.f32.mrb[0].mxu0
    %v1066 = vadd.f32 %v1023, %v1065
    %v1067 = vpop.f32.mrb[0].mxu0
    %v1068 = vadd.f32 %v1025, %v1067
    %v1069 = vpop.f32.mrb[0].mxu0
    %v1070 = vadd.f32 %v1027, %v1069
    %v1071 = vpop.f32.mrb[0].mxu0
    %v1072 = vadd.f32 %v1029, %v1071
    %1073 = vdwg.mxu0
    %1074 = vmatprep.subr.bf16.mxu0 0
    %1075 = vmatpush1.bf16.msra.mxu0 %v727
    %1076 = vmatprep.subr.bf16.mxu0 0
    %1077 = vmatpush1.bf16.msra.mxu0 %v730
    %1078 = vmatprep.subr.bf16.mxu0 0
    %1079 = vmatpush1.bf16.msra.mxu0 %v733
    %1080 = vmatprep.subr.bf16.mxu0 0
    %1081 = vmatpush1.bf16.msra.mxu0 %v736
    %1082 = vmatprep.subr.bf16.mxu0 0
    %1083 = vmatpush1.bf16.msra.mxu0 %v739
    %1084 = vmatprep.subr.bf16.mxu0 0
    %1085 = vmatpush1.bf16.msra.mxu0 %v742
    %1086 = vmatprep.subr.bf16.mxu0 0
    %1087 = vmatpush1.bf16.msra.mxu0 %v745
    %1088 = vmatprep.subr.bf16.mxu0 0
    %1089 = vmatpush1.bf16.msra.mxu0 %v748
    %1090 = vmatprep.subr.bf16.mxu0 0
    %1091 = vmatpush1.bf16.msra.mxu0 %v751
    %1092 = vmatprep.subr.bf16.mxu0 0
    %1093 = vmatpush1.bf16.msra.mxu0 %v754
    %1094 = vmatprep.subr.bf16.mxu0 0
    %1095 = vmatpush1.bf16.msra.mxu0 %v757
    %1096 = vmatprep.subr.bf16.mxu0 0
    %1097 = vmatpush1.bf16.msra.mxu0 %v760
    %1098 = vmatprep.subr.bf16.mxu0 0
    %1099 = vmatpush1.bf16.msra.mxu0 %v763
    %1100 = vmatprep.subr.bf16.mxu0 0
    %1101 = vmatpush1.bf16.msra.mxu0 %v766
    %1102 = vmatprep.subr.bf16.mxu0 0
    %1103 = vmatpush1.bf16.msra.mxu0 %v769
    %1104 = vmatprep.subr.bf16.mxu0 0
    %1105 = vmatpush1.bf16.msra.mxu0 %v772
    %1106 = vmatprep.mubr.bf16.mxu0 %v357
    %1107 = vmatmul.mubr.bf16.gmra.mrb[0].mxu0 %v356
    %v1108 = vpop.f32.mrb[0].mxu0
    %v1109 = vadd.f32 %v336, %v1108
    %v1110 = vpop.f32.mrb[0].mxu0
    %v1111 = vpop.f32.mrb[0].mxu0
    %v1112 = vadd.f32 %v336, %v1111
    %v1113 = vpop.f32.mrb[0].mxu0
    %1114 = vdwg.mxu0
    %1115 = vmatprep.subr.bf16.mxu0 0
    %1116 = vmatpush1.bf16.msra.mxu0 %v775
    %1117 = vmatprep.subr.bf16.mxu0 0
    %1118 = vmatpush1.bf16.msra.mxu0 %v778
    %1119 = vmatprep.subr.bf16.mxu0 0
    %1120 = vmatpush1.bf16.msra.mxu0 %v781
    %1121 = vmatprep.subr.bf16.mxu0 0
    %1122 = vmatpush1.bf16.msra.mxu0 %v784
    %1123 = vmatprep.subr.bf16.mxu0 0
    %1124 = vmatpush1.bf16.msra.mxu0 %v787
    %1125 = vmatprep.subr.bf16.mxu0 0
    %1126 = vmatpush1.bf16.msra.mxu0 %v790
    %1127 = vmatprep.subr.bf16.mxu0 0
    %1128 = vmatpush1.bf16.msra.mxu0 %v793
    %1129 = vmatprep.subr.bf16.mxu0 0
    %1130 = vmatpush1.bf16.msra.mxu0 %v796
    %1131 = vmatprep.subr.bf16.mxu0 0
    %1132 = vmatpush1.bf16.msra.mxu0 %v799
    %1133 = vmatprep.subr.bf16.mxu0 0
    %1134 = vmatpush1.bf16.msra.mxu0 %v802
    %1135 = vmatprep.subr.bf16.mxu0 0
    %1136 = vmatpush1.bf16.msra.mxu0 %v805
    %1137 = vmatprep.subr.bf16.mxu0 0
    %1138 = vmatpush1.bf16.msra.mxu0 %v808
    %1139 = vmatprep.subr.bf16.mxu0 0
    %1140 = vmatpush1.bf16.msra.mxu0 %v811
    %1141 = vmatprep.subr.bf16.mxu0 0
    %1142 = vmatpush1.bf16.msra.mxu0 %v814
    %1143 = vmatprep.subr.bf16.mxu0 0
    %1144 = vmatpush1.bf16.msra.mxu0 %v817
    %1145 = vmatprep.subr.bf16.mxu0 0
    %1146 = vmatpush1.bf16.msra.mxu0 %v820
    %1147 = vmatprep.mubr.bf16.mxu0 %v359
    %1148 = vmatmul.mubr.bf16.gmra.mrb[0].mxu0 %v358
    %v1149 = vpop.f32.mrb[0].mxu0
    %v1150 = vadd.f32 %v1109, %v1149
    %v1151 = vpop.f32.mrb[0].mxu0
    %v1152 = vpop.f32.mrb[0].mxu0
    %v1153 = vadd.f32 %v1112, %v1152
    %v1154 = vpop.f32.mrb[0].mxu0
    %1155 = vdwg.mxu0
    %1156 = vmatprep.subr.bf16.mxu0 0
    %1157 = vmatpush1.bf16.msra.mxu0 %v823
    %1158 = vmatprep.subr.bf16.mxu0 0
    %1159 = vmatpush1.bf16.msra.mxu0 %v826
    %1160 = vmatprep.subr.bf16.mxu0 0
    %1161 = vmatpush1.bf16.msra.mxu0 %v829
    %1162 = vmatprep.subr.bf16.mxu0 0
    %1163 = vmatpush1.bf16.msra.mxu0 %v832
    %1164 = vmatprep.subr.bf16.mxu0 0
    %1165 = vmatpush1.bf16.msra.mxu0 0
    %1166 = vmatprep.subr.bf16.mxu0 0
    %1167 = vmatpush1.bf16.msra.mxu0 0
    %1168 = vmatprep.subr.bf16.mxu0 0
    %1169 = vmatpush1.bf16.msra.mxu0 0
    %1170 = vmatprep.subr.bf16.mxu0 0
    %1171 = vmatpush1.bf16.msra.mxu0 0
    %1172 = vmatprep.subr.bf16.mxu0 0
    %1173 = vmatpush1.bf16.msra.mxu0 0
    %1174 = vmatprep.subr.bf16.mxu0 0
    %1175 = vmatpush1.bf16.msra.mxu0 0
    %1176 = vmatprep.subr.bf16.mxu0 0
    %1177 = vmatpush1.bf16.msra.mxu0 0
    %1178 = vmatprep.subr.bf16.mxu0 0
    %1179 = vmatpush1.bf16.msra.mxu0 0
    %1180 = vmatprep.subr.bf16.mxu0 0
    %1181 = vmatpush1.bf16.msra.mxu0 0
    %1182 = vmatprep.subr.bf16.mxu0 0
    %1183 = vmatpush1.bf16.msra.mxu0 0
    %1184 = vmatprep.subr.bf16.mxu0 0
    %1185 = vmatpush1.bf16.msra.mxu0 0
    %1186 = vmatprep.subr.bf16.mxu0 0
    %1187 = vmatpush1.bf16.msra.mxu0 0
    %1188 = vmatprep.mubr.bf16.mxu0 0
    %1189 = vmatmul.mubr.bf16.gmra.mrb[0].mxu0 %v943
    %v1190 = vpop.f32.mrb[0].mxu0
    %v1191 = vadd.f32 %v1150, %v1190
    %v1192 = vpop.f32.mrb[0].mxu0
    %v1193 = vpop.f32.mrb[0].mxu0
    %v1194 = vadd.f32 %v1153, %v1193
    %v1195 = vpop.f32.mrb[0].mxu0
    %1196 = vdwg.mxu0
    %v1197 = vmax.f32 %v1066, 0.0
    %v1198 = vmax.f32 %v1068, 0.0
    %v1199 = vmax.f32 %v1191, 0.0
    %v1200 = vmax.f32 %v1070, 0.0
    %v1201 = vmax.f32 %v1072, 0.0
    %v1202 = vmax.f32 %v1194, 0.0
    %v1203 = vpack.c.bf16 %v1200, %v1197
    %v1204 = vpack.c.bf16 %v1201, %v1198
    %v1205 = vpack.c.bf16 %v1202, %v1199
    %v1207 = vlaneseq
    %v1208 = vshrl.u32 %v1207, 7
    %v1209 = vsub.s32 0, %v1208
    %v1210 = vrot.slane %v286, %v1209
    %v1211 = vlaneseq
    %v1212 = vshrl.u32 %v1211, 7
    %v1213 = vsub.s32 1, %v1212
    %v1214 = vrot.slane %v286, %v1213
    %v1215 = vlaneseq
    %v1216 = vshrl.u32 %v1215, 7
    %v1217 = vsub.s32 2, %v1216
    %v1218 = vrot.slane %v286, %v1217
    %v1294 = vunpack.c.l.b16 %v214
    %v1295 = vunpack.c.h.b16 %v214
    %v1296 = vunpack.c.l.b16 %v215
    %v1297 = vunpack.c.l.b16 %v216
    %v1298 = vunpack.c.h.b16 %v216
    %v1299 = vunpack.c.l.b16 %v217
    %v1300 = vunpack.c.l.b16 %v218
    %v1301 = vunpack.c.h.b16 %v218
    %v1302 = vunpack.c.l.b16 %v219
    %v1303 = vunpack.c.l.b16 %v220
    %v1304 = vunpack.c.h.b16 %v220
    %v1305 = vunpack.c.l.b16 %v221
    %v1306 = vunpack.c.l.b16 %v222
    %v1307 = vunpack.c.h.b16 %v222
    %v1308 = vunpack.c.l.b16 %v223
    %v1309 = vunpack.c.l.b16 %v224
    %v1310 = vunpack.c.h.b16 %v224
    %v1311 = vunpack.c.l.b16 %v225
    %v1312 = vunpack.c.l.b16 %v226
    %v1313 = vunpack.c.h.b16 %v226
    %v1314 = vunpack.c.l.b16 %v227
    %v1315 = vunpack.c.l.b16 %v228
    %v1316 = vunpack.c.h.b16 %v228
    %v1317 = vunpack.c.l.b16 %v229
    %v1318 = vunpack.c.l.b16 %v230
    %v1319 = vunpack.c.h.b16 %v230
    %v1320 = vunpack.c.l.b16 %v231
    %v1321 = vunpack.c.l.b16 %v232
    %v1322 = vunpack.c.h.b16 %v232
    %v1323 = vunpack.c.l.b16 %v233
    %v1324 = vunpack.c.l.b16 %v234
    %v1325 = vunpack.c.h.b16 %v234
    %v1326 = vunpack.c.l.b16 %v235
    %v1327 = vunpack.c.l.b16 %v236
    %v1328 = vunpack.c.h.b16 %v236
    %v1329 = vunpack.c.l.b16 %v237
    %v1330 = vunpack.c.l.b16 %v238
    %v1331 = vunpack.c.h.b16 %v238
    %v1332 = vunpack.c.l.b16 %v239
    %v1333 = vunpack.c.l.b16 %v240
    %v1334 = vunpack.c.h.b16 %v240
    %v1335 = vunpack.c.l.b16 %v241
    %v1336 = vunpack.c.l.b16 %v242
    %v1337 = vunpack.c.h.b16 %v242
    %v1338 = vunpack.c.l.b16 %v243
    %v1339 = vunpack.c.l.b16 %v244
    %v1340 = vunpack.c.h.b16 %v244
    %v1341 = vunpack.c.l.b16 %v245
    %v1342 = vunpack.c.l.b16 %v246
    %v1343 = vunpack.c.h.b16 %v246
    %v1344 = vunpack.c.l.b16 %v247
    %v1345 = vunpack.c.l.b16 %v248
    %v1346 = vunpack.c.h.b16 %v248
    %v1347 = vunpack.c.l.b16 %v249
    %v1348 = vunpack.c.l.b16 %v250
    %v1349 = vunpack.c.h.b16 %v250
    %v1350 = vunpack.c.l.b16 %v251
    %v1351 = vunpack.c.l.b16 %v252
    %v1352 = vunpack.c.h.b16 %v252
    %v1353 = vunpack.c.l.b16 %v253
    %v1354 = vunpack.c.l.b16 %v254
    %v1355 = vunpack.c.h.b16 %v254
    %v1356 = vunpack.c.l.b16 %v255
    %v1357 = vunpack.c.l.b16 %v256
    %v1358 = vunpack.c.h.b16 %v256
    %v1359 = vunpack.c.l.b16 %v257
    %v1360 = vunpack.c.l.b16 %v258
    %v1361 = vunpack.c.h.b16 %v258
    %v1362 = vunpack.c.l.b16 %v259
    %v1363 = vunpack.c.l.b16 %v260
    %v1364 = vunpack.c.h.b16 %v260
    %v1365 = vunpack.c.l.b16 %v261
    %v1366 = vunpack.c.l.b16 %v262
    %v1367 = vunpack.c.h.b16 %v262
    %v1368 = vunpack.c.l.b16 %v263
    %v1369 = vunpack.c.l.b16 %v264
    %v1370 = vunpack.c.h.b16 %v264
    %v1371 = vunpack.c.l.b16 %v265
    %v1372 = vunpack.c.l.b16 %v266
    %v1373 = vunpack.c.h.b16 %v266
    %v1374 = vunpack.c.l.b16 %v267
    %v1375 = vunpack.c.l.b16 %v268
    %v1376 = vunpack.c.h.b16 %v268
    %v1377 = vunpack.c.l.b16 %v269
    %v1378 = vunpack.c.l.b16 %v270
    %v1379 = vunpack.c.h.b16 %v270
    %v1380 = vunpack.c.l.b16 %v271
    %v1381 = vunpack.c.l.b16 %v272
    %v1382 = vunpack.c.h.b16 %v272
    %v1383 = vunpack.c.l.b16 %v273
    %v1384 = vunpack.c.l.b16 %v274
    %v1385 = vunpack.c.h.b16 %v274
    %v1386 = vunpack.c.l.b16 %v275
    %v1387 = vunpack.c.l.b16 %v276
    %v1388 = vunpack.c.h.b16 %v276
    %v1389 = vunpack.c.l.b16 %v277
    %v1390 = vunpack.c.l.b16 %v278
    %v1391 = vunpack.c.h.b16 %v278
    %v1392 = vunpack.c.l.b16 %v279
    %v1393 = vunpack.c.l.b16 %v280
    %v1394 = vunpack.c.h.b16 %v280
    %v1395 = vunpack.c.l.b16 %v281
    %v1396 = vunpack.c.l.b16 %v282
    %v1397 = vunpack.c.h.b16 %v282
    %v1398 = vunpack.c.l.b16 %v283
    %v1399 = vunpack.c.l.b16 %v284
    %v1400 = vunpack.c.h.b16 %v284
    %v1401 = vunpack.c.l.b16 %v285
    %v1402 = vpack.c.b16 %v1297, %v1294
    %v1403 = vpack.c.b16 %v1298, %v1295
    %v1404 = vpack.c.b16 %v1299, %v1296
    %v1405 = vpack.c.b16 %v1303, %v1300
    %v1406 = vpack.c.b16 %v1304, %v1301
    %v1407 = vpack.c.b16 %v1305, %v1302
    %v1408 = vpack.c.b16 %v1309, %v1306
    %v1409 = vpack.c.b16 %v1310, %v1307
    %v1410 = vpack.c.b16 %v1311, %v1308
    %v1411 = vpack.c.b16 %v1315, %v1312
    %v1412 = vpack.c.b16 %v1316, %v1313
    %v1413 = vpack.c.b16 %v1317, %v1314
    %v1414 = vpack.c.b16 %v1321, %v1318
    %v1415 = vpack.c.b16 %v1322, %v1319
    %v1416 = vpack.c.b16 %v1323, %v1320
    %v1417 = vpack.c.b16 %v1327, %v1324
    %v1418 = vpack.c.b16 %v1328, %v1325
    %v1419 = vpack.c.b16 %v1329, %v1326
    %v1420 = vpack.c.b16 %v1333, %v1330
    %v1421 = vpack.c.b16 %v1334, %v1331
    %v1422 = vpack.c.b16 %v1335, %v1332
    %v1423 = vpack.c.b16 %v1339, %v1336
    %v1424 = vpack.c.b16 %v1340, %v1337
    %v1425 = vpack.c.b16 %v1341, %v1338
    %v1426 = vpack.c.b16 %v1345, %v1342
    %v1427 = vpack.c.b16 %v1346, %v1343
    %v1428 = vpack.c.b16 %v1347, %v1344
    %v1429 = vpack.c.b16 %v1351, %v1348
    %v1430 = vpack.c.b16 %v1352, %v1349
    %v1431 = vpack.c.b16 %v1353, %v1350
    %v1432 = vpack.c.b16 %v1357, %v1354
    %v1433 = vpack.c.b16 %v1358, %v1355
    %v1434 = vpack.c.b16 %v1359, %v1356
    %v1435 = vpack.c.b16 %v1363, %v1360
    %v1436 = vpack.c.b16 %v1364, %v1361
    %v1437 = vpack.c.b16 %v1365, %v1362
    %v1438 = vpack.c.b16 %v1369, %v1366
    %v1439 = vpack.c.b16 %v1370, %v1367
    %v1440 = vpack.c.b16 %v1371, %v1368
    %v1441 = vpack.c.b16 %v1375, %v1372
    %v1442 = vpack.c.b16 %v1376, %v1373
    %v1443 = vpack.c.b16 %v1377, %v1374
    %v1444 = vpack.c.b16 %v1381, %v1378
    %v1445 = vpack.c.b16 %v1382, %v1379
    %v1446 = vpack.c.b16 %v1383, %v1380
    %v1447 = vpack.c.b16 %v1387, %v1384
    %v1448 = vpack.c.b16 %v1388, %v1385
    %v1449 = vpack.c.b16 %v1389, %v1386
    %v1450 = vpack.c.b16 %v1393, %v1390
    %v1451 = vpack.c.b16 %v1394, %v1391
    %v1452 = vpack.c.b16 %v1395, %v1392
    %v1453 = vpack.c.b16 %v1399, %v1396
    %v1454 = vpack.c.b16 %v1400, %v1397
    %v1455 = vpack.c.b16 %v1401, %v1398
    %vm1510 = vcmask 261120
    %v1512 = vsel %vm1510, %v1205, 0
    %1514 = vmatprep.subr.bf16.mxu0 %v1403
    %1515 = vmatpush1.bf16.msra.mxu0 %v1402
    %1516 = vmatprep.subr.bf16.mxu0 %v1406
    %1517 = vmatpush1.bf16.msra.mxu0 %v1405
    %1518 = vmatprep.subr.bf16.mxu0 %v1409
    %1519 = vmatpush1.bf16.msra.mxu0 %v1408
    %1520 = vmatprep.subr.bf16.mxu0 %v1412
    %1521 = vmatpush1.bf16.msra.mxu0 %v1411
    %1522 = vmatprep.subr.bf16.mxu0 %v1415
    %1523 = vmatpush1.bf16.msra.mxu0 %v1414
    %1524 = vmatprep.subr.bf16.mxu0 %v1418
    %1525 = vmatpush1.bf16.msra.mxu0 %v1417
    %1526 = vmatprep.subr.bf16.mxu0 %v1421
    %1527 = vmatpush1.bf16.msra.mxu0 %v1420
    %1528 = vmatprep.subr.bf16.mxu0 %v1424
    %1529 = vmatpush1.bf16.msra.mxu0 %v1423
    %1530 = vmatprep.subr.bf16.mxu0 %v1427
    %1531 = vmatpush1.bf16.msra.mxu0 %v1426
    %1532 = vmatprep.subr.bf16.mxu0 %v1430
    %1533 = vmatpush1.bf16.msra.mxu0 %v1429
    %1534 = vmatprep.subr.bf16.mxu0 %v1433
    %1535 = vmatpush1.bf16.msra.mxu0 %v1432
    %1536 = vmatprep.subr.bf16.mxu0 %v1436
    %1537 = vmatpush1.bf16.msra.mxu0 %v1435
    %1538 = vmatprep.subr.bf16.mxu0 %v1439
    %1539 = vmatpush1.bf16.msra.mxu0 %v1438
    %1540 = vmatprep.subr.bf16.mxu0 %v1442
    %1541 = vmatpush1.bf16.msra.mxu0 %v1441
    %1542 = vmatprep.subr.bf16.mxu0 %v1445
    %1543 = vmatpush1.bf16.msra.mxu0 %v1444
    %1544 = vmatprep.subr.bf16.mxu0 %v1448
    %1545 = vmatpush1.bf16.msra.mxu0 %v1447
    %1546 = vmatprep.mubr.bf16.mxu0 %v1204
    %1547 = vmatmul.mubr.bf16.gmra.mrb[0].mxu0 %v1203
    %v1548 = vpop.f32.mrb[0].mxu0
    %v1549 = vadd.f32 %v1210, %v1548
    %v1550 = vpop.f32.mrb[0].mxu0
    %v1551 = vadd.f32 %v1214, %v1550
    %v1552 = vpop.f32.mrb[0].mxu0
    %v1553 = vadd.f32 %v1210, %v1552
    %v1554 = vpop.f32.mrb[0].mxu0
    %v1555 = vadd.f32 %v1214, %v1554
    %1556 = vdwg.mxu0
    %1557 = vmatprep.subr.bf16.mxu0 %v1451
    %1558 = vmatpush1.bf16.msra.mxu0 %v1450
    %1559 = vmatprep.subr.bf16.mxu0 %v1454
    %1560 = vmatpush1.bf16.msra.mxu0 %v1453
    %1561 = vmatprep.subr.bf16.mxu0 0
    %1562 = vmatpush1.bf16.msra.mxu0 0
    %1563 = vmatprep.subr.bf16.mxu0 0
    %1564 = vmatpush1.bf16.msra.mxu0 0
    %1565 = vmatprep.subr.bf16.mxu0 0
    %1566 = vmatpush1.bf16.msra.mxu0 0
    %1567 = vmatprep.subr.bf16.mxu0 0
    %1568 = vmatpush1.bf16.msra.mxu0 0
    %1569 = vmatprep.subr.bf16.mxu0 0
    %1570 = vmatpush1.bf16.msra.mxu0 0
    %1571 = vmatprep.subr.bf16.mxu0 0
    %1572 = vmatpush1.bf16.msra.mxu0 0
    %1573 = vmatprep.subr.bf16.mxu0 0
    %1574 = vmatpush1.bf16.msra.mxu0 0
    %1575 = vmatprep.subr.bf16.mxu0 0
    %1576 = vmatpush1.bf16.msra.mxu0 0
    %1577 = vmatprep.subr.bf16.mxu0 0
    %1578 = vmatpush1.bf16.msra.mxu0 0
    %1579 = vmatprep.subr.bf16.mxu0 0
    %1580 = vmatpush1.bf16.msra.mxu0 0
    %1581 = vmatprep.subr.bf16.mxu0 0
    %1582 = vmatpush1.bf16.msra.mxu0 0
    %1583 = vmatprep.subr.bf16.mxu0 0
    %1584 = vmatpush1.bf16.msra.mxu0 0
    %1585 = vmatprep.subr.bf16.mxu0 0
    %1586 = vmatpush1.bf16.msra.mxu0 0
    %1587 = vmatprep.subr.bf16.mxu0 0
    %1588 = vmatpush1.bf16.msra.mxu0 0
    %1589 = vmatprep.mubr.bf16.mxu0 0
    %1590 = vmatmul.mubr.bf16.gmra.mrb[0].mxu0 %v1512
    %v1591 = vpop.f32.mrb[0].mxu0
    %v1592 = vadd.f32 %v1549, %v1591
    %v1593 = vpop.f32.mrb[0].mxu0
    %v1594 = vadd.f32 %v1551, %v1593
    %v1595 = vpop.f32.mrb[0].mxu0
    %v1596 = vadd.f32 %v1553, %v1595
    %v1597 = vpop.f32.mrb[0].mxu0
    %v1598 = vadd.f32 %v1555, %v1597
    %1599 = vdwg.mxu0
    %1600 = vmatprep.subr.bf16.mxu0 0
    %1601 = vmatpush1.bf16.msra.mxu0 %v1404
    %1602 = vmatprep.subr.bf16.mxu0 0
    %1603 = vmatpush1.bf16.msra.mxu0 %v1407
    %1604 = vmatprep.subr.bf16.mxu0 0
    %1605 = vmatpush1.bf16.msra.mxu0 %v1410
    %1606 = vmatprep.subr.bf16.mxu0 0
    %1607 = vmatpush1.bf16.msra.mxu0 %v1413
    %1608 = vmatprep.subr.bf16.mxu0 0
    %1609 = vmatpush1.bf16.msra.mxu0 %v1416
    %1610 = vmatprep.subr.bf16.mxu0 0
    %1611 = vmatpush1.bf16.msra.mxu0 %v1419
    %1612 = vmatprep.subr.bf16.mxu0 0
    %1613 = vmatpush1.bf16.msra.mxu0 %v1422
    %1614 = vmatprep.subr.bf16.mxu0 0
    %1615 = vmatpush1.bf16.msra.mxu0 %v1425
    %1616 = vmatprep.subr.bf16.mxu0 0
    %1617 = vmatpush1.bf16.msra.mxu0 %v1428
    %1618 = vmatprep.subr.bf16.mxu0 0
    %1619 = vmatpush1.bf16.msra.mxu0 %v1431
    %1620 = vmatprep.subr.bf16.mxu0 0
    %1621 = vmatpush1.bf16.msra.mxu0 %v1434
    %1622 = vmatprep.subr.bf16.mxu0 0
    %1623 = vmatpush1.bf16.msra.mxu0 %v1437
    %1624 = vmatprep.subr.bf16.mxu0 0
    %1625 = vmatpush1.bf16.msra.mxu0 %v1440
    %1626 = vmatprep.subr.bf16.mxu0 0
    %1627 = vmatpush1.bf16.msra.mxu0 %v1443
    %1628 = vmatprep.subr.bf16.mxu0 0
    %1629 = vmatpush1.bf16.msra.mxu0 %v1446
    %1630 = vmatprep.subr.bf16.mxu0 0
    %1631 = vmatpush1.bf16.msra.mxu0 %v1449
    %1632 = vmatprep.mubr.bf16.mxu0 %v1204
    %1633 = vmatmul.mubr.bf16.gmra.mrb[0].mxu0 %v1203
    %v1634 = vpop.f32.mrb[0].mxu0
    %v1635 = vadd.f32 %v1218, %v1634
    %v1636 = vpop.f32.mrb[0].mxu0
    %v1637 = vpop.f32.mrb[0].mxu0
    %v1638 = vadd.f32 %v1218, %v1637
    %v1639 = vpop.f32.mrb[0].mxu0
    %1640 = vdwg.mxu0
    %1641 = vmatprep.subr.bf16.mxu0 0
    %1642 = vmatpush1.bf16.msra.mxu0 %v1452
    %1643 = vmatprep.subr.bf16.mxu0 0
    %1644 = vmatpush1.bf16.msra.mxu0 %v1455
    %1645 = vmatprep.subr.bf16.mxu0 0
    %1646 = vmatpush1.bf16.msra.mxu0 0
    %1647 = vmatprep.subr.bf16.mxu0 0
    %1648 = vmatpush1.bf16.msra.mxu0 0
    %1649 = vmatprep.subr.bf16.mxu0 0
    %1650 = vmatpush1.bf16.msra.mxu0 0
    %1651 = vmatprep.subr.bf16.mxu0 0
    %1652 = vmatpush1.bf16.msra.mxu0 0
    %1653 = vmatprep.subr.bf16.mxu0 0
    %1654 = vmatpush1.bf16.msra.mxu0 0
    %1655 = vmatprep.subr.bf16.mxu0 0
    %1656 = vmatpush1.bf16.msra.mxu0 0
    %1657 = vmatprep.subr.bf16.mxu0 0
    %1658 = vmatpush1.bf16.msra.mxu0 0
    %1659 = vmatprep.subr.bf16.mxu0 0
    %1660 = vmatpush1.bf16.msra.mxu0 0
    %1661 = vmatprep.subr.bf16.mxu0 0
    %1662 = vmatpush1.bf16.msra.mxu0 0
    %1663 = vmatprep.subr.bf16.mxu0 0
    %1664 = vmatpush1.bf16.msra.mxu0 0
    %1665 = vmatprep.subr.bf16.mxu0 0
    %1666 = vmatpush1.bf16.msra.mxu0 0
    %1667 = vmatprep.subr.bf16.mxu0 0
    %1668 = vmatpush1.bf16.msra.mxu0 0
    %1669 = vmatprep.subr.bf16.mxu0 0
    %1670 = vmatpush1.bf16.msra.mxu0 0
    %1671 = vmatprep.subr.bf16.mxu0 0
    %1672 = vmatpush1.bf16.msra.mxu0 0
    %1673 = vmatprep.mubr.bf16.mxu0 0
    %1674 = vmatmul.mubr.bf16.gmra.mrb[0].mxu0 %v1512
    %v1675 = vpop.f32.mrb[0].mxu0
    %v1676 = vadd.f32 %v1635, %v1675
    %v1677 = vpop.f32.mrb[0].mxu0
    %v1678 = vpop.f32.mrb[0].mxu0
    %v1679 = vadd.f32 %v1638, %v1678
    %v1680 = vpop.f32.mrb[0].mxu0
    %1681 = vdwg.mxu0
    %v1682 = vmax.f32 %v1592, 0.0
    %v1683 = vmax.f32 %v1594, 0.0
    %v1684 = vmax.f32 %v1676, 0.0
    %v1685 = vmax.f32 %v1596, 0.0
    %v1686 = vmax.f32 %v1598, 0.0
    %v1687 = vmax.f32 %v1679, 0.0
    %v1688 = vpack.c.bf16 %v1685, %v1682
    %v1689 = vpack.c.bf16 %v1686, %v1683
    %v1690 = vpack.c.bf16 %v1687, %v1684
    %v1691 = vunpack.c.l.bf16 %v323
    %v1692 = vlaneseq
    %v1693 = vshrl.u32 %v1692, 7
    %v1694 = vsub.s32 0, %v1693
    %v1695 = vrot.slane %v1691, %v1694
    %v1732 = vunpack.c.l.b16 %v287
    %v1733 = vunpack.c.l.b16 %v288
    %v1734 = vunpack.c.l.b16 %v289
    %v1735 = vunpack.c.l.b16 %v290
    %v1736 = vunpack.c.l.b16 %v291
    %v1737 = vunpack.c.l.b16 %v292
    %v1738 = vunpack.c.l.b16 %v293
    %v1739 = vunpack.c.l.b16 %v294
    %v1740 = vunpack.c.l.b16 %v295
    %v1741 = vunpack.c.l.b16 %v296
    %v1742 = vunpack.c.l.b16 %v297
    %v1743 = vunpack.c.l.b16 %v298
    %v1744 = vunpack.c.l.b16 %v299
    %v1745 = vunpack.c.l.b16 %v300
    %v1746 = vunpack.c.l.b16 %v301
    %v1747 = vunpack.c.l.b16 %v302
    %v1748 = vunpack.c.l.b16 %v303
    %v1749 = vunpack.c.l.b16 %v304
    %v1750 = vunpack.c.l.b16 %v305
    %v1751 = vunpack.c.l.b16 %v306
    %v1752 = vunpack.c.l.b16 %v307
    %v1753 = vunpack.c.l.b16 %v308
    %v1754 = vunpack.c.l.b16 %v309
    %v1755 = vunpack.c.l.b16 %v310
    %v1756 = vunpack.c.l.b16 %v311
    %v1757 = vunpack.c.l.b16 %v312
    %v1758 = vunpack.c.l.b16 %v313
    %v1759 = vunpack.c.l.b16 %v314
    %v1760 = vunpack.c.l.b16 %v315
    %v1761 = vunpack.c.l.b16 %v316
    %v1762 = vunpack.c.l.b16 %v317
    %v1763 = vunpack.c.l.b16 %v318
    %v1764 = vunpack.c.l.b16 %v319
    %v1765 = vunpack.c.l.b16 %v320
    %v1766 = vunpack.c.l.b16 %v321
    %v1767 = vunpack.c.l.b16 %v322
    %v1768 = vpack.c.b16 %v1733, %v1732
    %v1769 = vpack.c.b16 %v1735, %v1734
    %v1770 = vpack.c.b16 %v1737, %v1736
    %v1771 = vpack.c.b16 %v1739, %v1738
    %v1772 = vpack.c.b16 %v1741, %v1740
    %v1773 = vpack.c.b16 %v1743, %v1742
    %v1774 = vpack.c.b16 %v1745, %v1744
    %v1775 = vpack.c.b16 %v1747, %v1746
    %v1776 = vpack.c.b16 %v1749, %v1748
    %v1777 = vpack.c.b16 %v1751, %v1750
    %v1778 = vpack.c.b16 %v1753, %v1752
    %v1779 = vpack.c.b16 %v1755, %v1754
    %v1780 = vpack.c.b16 %v1757, %v1756
    %v1781 = vpack.c.b16 %v1759, %v1758
    %v1782 = vpack.c.b16 %v1761, %v1760
    %v1783 = vpack.c.b16 %v1763, %v1762
    %v1784 = vpack.c.b16 %v1765, %v1764
    %v1785 = vpack.c.b16 %v1767, %v1766
    %v1805 = vsel %vm1510, %v1690, 0
    %1807 = vmatprep.subr.bf16.mxu0 0
    %1808 = vmatpush1.bf16.msra.mxu0 %v1768
    %1809 = vmatprep.subr.bf16.mxu0 0
    %1810 = vmatpush1.bf16.msra.mxu0 %v1769
    %1811 = vmatprep.subr.bf16.mxu0 0
    %1812 = vmatpush1.bf16.msra.mxu0 %v1770
    %1813 = vmatprep.subr.bf16.mxu0 0
    %1814 = vmatpush1.bf16.msra.mxu0 %v1771
    %1815 = vmatprep.subr.bf16.mxu0 0
    %1816 = vmatpush1.bf16.msra.mxu0 %v1772
    %1817 = vmatprep.subr.bf16.mxu0 0
    %1818 = vmatpush1.bf16.msra.mxu0 %v1773
    %1819 = vmatprep.subr.bf16.mxu0 0
    %1820 = vmatpush1.bf16.msra.mxu0 %v1774
    %1821 = vmatprep.subr.bf16.mxu0 0
    %1822 = vmatpush1.bf16.msra.mxu0 %v1775
    %1823 = vmatprep.subr.bf16.mxu0 0
    %1824 = vmatpush1.bf16.msra.mxu0 %v1776
    %1825 = vmatprep.subr.bf16.mxu0 0
    %1826 = vmatpush1.bf16.msra.mxu0 %v1777
    %1827 = vmatprep.subr.bf16.mxu0 0
    %1828 = vmatpush1.bf16.msra.mxu0 %v1778
    %1829 = vmatprep.subr.bf16.mxu0 0
    %1830 = vmatpush1.bf16.msra.mxu0 %v1779
    %1831 = vmatprep.subr.bf16.mxu0 0
    %1832 = vmatpush1.bf16.msra.mxu0 %v1780
    %1833 = vmatprep.subr.bf16.mxu0 0
    %1834 = vmatpush1.bf16.msra.mxu0 %v1781
    %1835 = vmatprep.subr.bf16.mxu0 0
    %1836 = vmatpush1.bf16.msra.mxu0 %v1782
    %1837 = vmatprep.subr.bf16.mxu0 0
    %1838 = vmatpush1.bf16.msra.mxu0 %v1783
    %1839 = vmatprep.mubr.bf16.mxu0 %v1689
    %1840 = vmatmul.mubr.bf16.gmra.mrb[0].mxu0 %v1688
    %v1841 = vpop.f32.mrb[0].mxu0
    %v1842 = vadd.f32 %v1695, %v1841
    %v1843 = vpop.f32.mrb[0].mxu0
    %v1844 = vpop.f32.mrb[0].mxu0
    %v1845 = vadd.f32 %v1695, %v1844
    %v1846 = vpop.f32.mrb[0].mxu0
    %1847 = vdwg.mxu0
    %1848 = vmatprep.subr.bf16.mxu0 0
    %1849 = vmatpush1.bf16.msra.mxu0 %v1784
    %1850 = vmatprep.subr.bf16.mxu0 0
    %1851 = vmatpush1.bf16.msra.mxu0 %v1785
    %1852 = vmatprep.subr.bf16.mxu0 0
    %1853 = vmatpush1.bf16.msra.mxu0 0
    %1854 = vmatprep.subr.bf16.mxu0 0
    %1855 = vmatpush1.bf16.msra.mxu0 0
    %1856 = vmatprep.subr.bf16.mxu0 0
    %1857 = vmatpush1.bf16.msra.mxu0 0
    %1858 = vmatprep.subr.bf16.mxu0 0
    %1859 = vmatpush1.bf16.msra.mxu0 0
    %1860 = vmatprep.subr.bf16.mxu0 0
    %1861 = vmatpush1.bf16.msra.mxu0 0
    %1862 = vmatprep.subr.bf16.mxu0 0
    %1863 = vmatpush1.bf16.msra.mxu0 0
    %1864 = vmatprep.subr.bf16.mxu0 0
    %1865 = vmatpush1.bf16.msra.mxu0 0
    %1866 = vmatprep.subr.bf16.mxu0 0
    %1867 = vmatpush1.bf16.msra.mxu0 0
    %1868 = vmatprep.subr.bf16.mxu0 0
    %1869 = vmatpush1.bf16.msra.mxu0 0
    %1870 = vmatprep.subr.bf16.mxu0 0
    %1871 = vmatpush1.bf16.msra.mxu0 0
    %1872 = vmatprep.subr.bf16.mxu0 0
    %1873 = vmatpush1.bf16.msra.mxu0 0
    %1874 = vmatprep.subr.bf16.mxu0 0
    %1875 = vmatpush1.bf16.msra.mxu0 0
    %1876 = vmatprep.subr.bf16.mxu0 0
    %1877 = vmatpush1.bf16.msra.mxu0 0
    %1878 = vmatprep.subr.bf16.mxu0 0
    %1879 = vmatpush1.bf16.msra.mxu0 0
    %1880 = vmatprep.mubr.bf16.mxu0 0
    %1881 = vmatmul.mubr.bf16.gmra.mrb[0].mxu0 %v1805
    %v1882 = vpop.f32.mrb[0].mxu0
    %v1883 = vadd.f32 %v1842, %v1882
    %v1884 = vpop.f32.mrb[0].mxu0
    %v1885 = vpop.f32.mrb[0].mxu0
    %v1886 = vadd.f32 %v1845, %v1885
    %v1887 = vpop.f32.mrb[0].mxu0
    %1888 = vdwg.mxu0
    %1889 = vst [vmem:[#allocation2] sm:$0xff] %v1883
    %1890 = vst [vmem:[#allocation2 + $0x8] sm:$0xff] %v1886
    %v1891 = vpack.c.bf16 %v1886, %v1883
    %v1924 = vunpack.c.l.b16 %v181
    %v1925 = vunpack.c.h.b16 %v181
    %v1926 = vunpack.c.l.b16 %v182
    %v1927 = vunpack.c.l.b16 %v183
    %v1928 = vunpack.c.h.b16 %v183
    %v1929 = vunpack.c.l.b16 %v184
    %v1930 = vunpack.c.l.b16 %v185
    %v1931 = vunpack.c.h.b16 %v185
    %v1932 = vunpack.c.l.b16 %v186
    %v1933 = vunpack.c.l.b16 %v187
    %v1934 = vunpack.c.h.b16 %v187
    %v1935 = vunpack.c.l.b16 %v188
    %v1936 = vunpack.c.l.b16 %v189
    %v1937 = vunpack.c.h.b16 %v189
    %v1938 = vunpack.c.l.b16 %v190
    %v1939 = vunpack.c.l.b16 %v191
    %v1940 = vunpack.c.h.b16 %v191
    %v1941 = vunpack.c.l.b16 %v192
    %v1942 = vunpack.c.l.b16 %v193
    %v1943 = vunpack.c.h.b16 %v193
    %v1944 = vunpack.c.l.b16 %v194
    %v1945 = vunpack.c.l.b16 %v195
    %v1946 = vunpack.c.h.b16 %v195
    %v1947 = vunpack.c.l.b16 %v196
    %v1948 = vunpack.c.l.b16 %v197
    %v1949 = vunpack.c.h.b16 %v197
    %v1950 = vunpack.c.l.b16 %v198
    %v1951 = vunpack.c.l.b16 %v199
    %v1952 = vunpack.c.h.b16 %v199
    %v1953 = vunpack.c.l.b16 %v200
    %v1954 = vunpack.c.l.b16 %v201
    %v1955 = vunpack.c.h.b16 %v201
    %v1956 = vunpack.c.l.b16 %v202
    %v1957 = vunpack.c.l.b16 %v203
    %v1958 = vunpack.c.h.b16 %v203
    %v1959 = vunpack.c.l.b16 %v204
    %v1960 = vunpack.c.l.b16 %v205
    %v1961 = vunpack.c.h.b16 %v205
    %v1962 = vunpack.c.l.b16 %v206
    %v1963 = vunpack.c.l.b16 %v207
    %v1964 = vunpack.c.h.b16 %v207
    %v1965 = vunpack.c.l.b16 %v208
    %v1966 = vunpack.c.l.b16 %v209
    %v1967 = vunpack.c.h.b16 %v209
    %v1968 = vunpack.c.l.b16 %v210
    %v1969 = vunpack.c.l.b16 %v211
    %v1970 = vunpack.c.h.b16 %v211
    %v1971 = vunpack.c.l.b16 %v212
    %v1972 = vpack.c.b16 %v1927, %v1924
    %v1973 = vpack.c.b16 %v1928, %v1925
    %v1974 = vpack.c.b16 %v1929, %v1926
    %v1975 = vpack.c.b16 %v1933, %v1930
    %v1976 = vpack.c.b16 %v1934, %v1931
    %v1977 = vpack.c.b16 %v1935, %v1932
    %v1978 = vpack.c.b16 %v1939, %v1936
    %v1979 = vpack.c.b16 %v1940, %v1937
    %v1980 = vpack.c.b16 %v1941, %v1938
    %v1981 = vpack.c.b16 %v1945, %v1942
    %v1982 = vpack.c.b16 %v1946, %v1943
    %v1983 = vpack.c.b16 %v1947, %v1944
    %v1984 = vpack.c.b16 %v1951, %v1948
    %v1985 = vpack.c.b16 %v1952, %v1949
    %v1986 = vpack.c.b16 %v1953, %v1950
    %v1987 = vpack.c.b16 %v1957, %v1954
    %v1988 = vpack.c.b16 %v1958, %v1955
    %v1989 = vpack.c.b16 %v1959, %v1956
    %v1990 = vpack.c.b16 %v1963, %v1960
    %v1991 = vpack.c.b16 %v1964, %v1961
    %v1992 = vpack.c.b16 %v1965, %v1962
    %v1993 = vpack.c.b16 %v1969, %v1966
    %v1994 = vpack.c.b16 %v1970, %v1967
    %v1995 = vpack.c.b16 %v1971, %v1968
    %2020 = vmatprep.subr.bf16.mxu0 %v1973
    %2021 = vmatpush1.bf16.msra.mxu0 %v1972
    %2022 = vmatprep.subr.bf16.mxu0 %v1976
    %2023 = vmatpush1.bf16.msra.mxu0 %v1975
    %2024 = vmatprep.subr.bf16.mxu0 %v1979
    %2025 = vmatpush1.bf16.msra.mxu0 %v1978
    %2026 = vmatprep.subr.bf16.mxu0 %v1982
    %2027 = vmatpush1.bf16.msra.mxu0 %v1981
    %2028 = vmatprep.subr.bf16.mxu0 %v1985
    %2029 = vmatpush1.bf16.msra.mxu0 %v1984
    %2030 = vmatprep.subr.bf16.mxu0 %v1988
    %2031 = vmatpush1.bf16.msra.mxu0 %v1987
    %2032 = vmatprep.subr.bf16.mxu0 %v1991
    %2033 = vmatpush1.bf16.msra.mxu0 %v1990
    %2034 = vmatprep.subr.bf16.mxu0 %v1994
    %2035 = vmatpush1.bf16.msra.mxu0 %v1993
    %2036 = vmatprep.subr.bf16.mxu0 0
    %2037 = vmatpush1.bf16.msra.mxu0 0
    %2038 = vmatprep.subr.bf16.mxu0 0
    %2039 = vmatpush1.bf16.msra.mxu0 0
    %2040 = vmatprep.subr.bf16.mxu0 0
    %2041 = vmatpush1.bf16.msra.mxu0 0
    %2042 = vmatprep.subr.bf16.mxu0 0
    %2043 = vmatpush1.bf16.msra.mxu0 0
    %2044 = vmatprep.subr.bf16.mxu0 0
    %2045 = vmatpush1.bf16.msra.mxu0 0
    %2046 = vmatprep.subr.bf16.mxu0 0
    %2047 = vmatpush1.bf16.msra.mxu0 0
    %2048 = vmatprep.subr.bf16.mxu0 0
    %2049 = vmatpush1.bf16.msra.mxu0 0
    %2050 = vmatprep.subr.bf16.mxu0 0
    %2051 = vmatpush1.bf16.msra.mxu0 0
    %2052 = vmatprep.mubr.bf16.mxu0 0
    %2053 = vmatmul.mubr.bf16.gmra.mrb[0].mxu0 %v1891
    %v2054 = vpop.f32.mrb[0].mxu0
    %v2055 = vadd.f32 0.0, %v2054
    %v2056 = vpop.f32.mrb[0].mxu0
    %v2057 = vadd.f32 0.0, %v2056
    %v2058 = vpop.f32.mrb[0].mxu0
    %v2059 = vadd.f32 0.0, %v2058
    %v2060 = vpop.f32.mrb[0].mxu0
    %v2061 = vadd.f32 0.0, %v2060
    %2062 = vdwg.mxu0
    %2063 = vmatprep.subr.bf16.mxu0 0
    %2064 = vmatpush1.bf16.msra.mxu0 %v1974
    %2065 = vmatprep.subr.bf16.mxu0 0
    %2066 = vmatpush1.bf16.msra.mxu0 %v1977
    %2067 = vmatprep.subr.bf16.mxu0 0
    %2068 = vmatpush1.bf16.msra.mxu0 %v1980
    %2069 = vmatprep.subr.bf16.mxu0 0
    %2070 = vmatpush1.bf16.msra.mxu0 %v1983
    %2071 = vmatprep.subr.bf16.mxu0 0
    %2072 = vmatpush1.bf16.msra.mxu0 %v1986
    %2073 = vmatprep.subr.bf16.mxu0 0
    %2074 = vmatpush1.bf16.msra.mxu0 %v1989
    %2075 = vmatprep.subr.bf16.mxu0 0
    %2076 = vmatpush1.bf16.msra.mxu0 %v1992
    %2077 = vmatprep.subr.bf16.mxu0 0
    %2078 = vmatpush1.bf16.msra.mxu0 %v1995
    %2079 = vmatprep.subr.bf16.mxu0 0
    %2080 = vmatpush1.bf16.msra.mxu0 0
    %2081 = vmatprep.subr.bf16.mxu0 0
    %2082 = vmatpush1.bf16.msra.mxu0 0
    %2083 = vmatprep.subr.bf16.mxu0 0
    %2084 = vmatpush1.bf16.msra.mxu0 0
    %2085 = vmatprep.subr.bf16.mxu0 0
    %2086 = vmatpush1.bf16.msra.mxu0 0
    %2087 = vmatprep.subr.bf16.mxu0 0
    %2088 = vmatpush1.bf16.msra.mxu0 0
    %2089 = vmatprep.subr.bf16.mxu0 0
    %2090 = vmatpush1.bf16.msra.mxu0 0
    %2091 = vmatprep.subr.bf16.mxu0 0
    %2092 = vmatpush1.bf16.msra.mxu0 0
    %2093 = vmatprep.subr.bf16.mxu0 0
    %2094 = vmatpush1.bf16.msra.mxu0 0
    %2095 = vmatprep.mubr.bf16.mxu0 0
    %2096 = vmatmul.mubr.bf16.gmra.mrb[0].mxu0 %v1891
    %v2097 = vpop.f32.mrb[0].mxu0
    %v2098 = vadd.f32 0.0, %v2097
    %v2099 = vpop.f32.mrb[0].mxu0
    %v2100 = vpop.f32.mrb[0].mxu0
    %v2101 = vadd.f32 0.0, %v2100
    %v2102 = vpop.f32.mrb[0].mxu0
    %2103 = vdwg.mxu0
    %v2104 = vadd.f32 %v1066, %v2055
    %v2105 = vadd.f32 %v1068, %v2057
    %v2106 = vadd.f32 %v1191, %v2098
    %v2107 = vadd.f32 %v1070, %v2059
    %v2108 = vadd.f32 %v1072, %v2061
    %v2109 = vadd.f32 %v1194, %v2101
    %v2110 = vmax.f32 %v2104, 0.0
    %v2111 = vmax.f32 %v2105, 0.0
    %v2112 = vmax.f32 %v2106, 0.0
    %v2113 = vmax.f32 %v2107, 0.0
    %v2114 = vmax.f32 %v2108, 0.0
    %v2115 = vmax.f32 %v2109, 0.0
    %v2116 = vpack.c.bf16 %v2113, %v2110
    %v2117 = vpack.c.bf16 %v2114, %v2111
    %v2118 = vpack.c.bf16 %v2115, %v2112
    %v2120 = vsel %vm1510, %v2118, 0
    %2122 = vmatprep.subr.bf16.mxu0 %v1403
    %2123 = vmatpush1.bf16.msra.mxu0 %v1402
    %2124 = vmatprep.subr.bf16.mxu0 %v1406
    %2125 = vmatpush1.bf16.msra.mxu0 %v1405
    %2126 = vmatprep.subr.bf16.mxu0 %v1409
    %2127 = vmatpush1.bf16.msra.mxu0 %v1408
    %2128 = vmatprep.subr.bf16.mxu0 %v1412
    %2129 = vmatpush1.bf16.msra.mxu0 %v1411
    %2130 = vmatprep.subr.bf16.mxu0 %v1415
    %2131 = vmatpush1.bf16.msra.mxu0 %v1414
    %2132 = vmatprep.subr.bf16.mxu0 %v1418
    %2133 = vmatpush1.bf16.msra.mxu0 %v1417
    %2134 = vmatprep.subr.bf16.mxu0 %v1421
    %2135 = vmatpush1.bf16.msra.mxu0 %v1420
    %2136 = vmatprep.subr.bf16.mxu0 %v1424
    %2137 = vmatpush1.bf16.msra.mxu0 %v1423
    %2138 = vmatprep.subr.bf16.mxu0 %v1427
    %2139 = vmatpush1.bf16.msra.mxu0 %v1426
    %2140 = vmatprep.subr.bf16.mxu0 %v1430
    %2141 = vmatpush1.bf16.msra.mxu0 %v1429
    %2142 = vmatprep.subr.bf16.mxu0 %v1433
    %2143 = vmatpush1.bf16.msra.mxu0 %v1432
    %2144 = vmatprep.subr.bf16.mxu0 %v1436
    %2145 = vmatpush1.bf16.msra.mxu0 %v1435
    %2146 = vmatprep.subr.bf16.mxu0 %v1439
    %2147 = vmatpush1.bf16.msra.mxu0 %v1438
    %2148 = vmatprep.subr.bf16.mxu0 %v1442
    %2149 = vmatpush1.bf16.msra.mxu0 %v1441
    %2150 = vmatprep.subr.bf16.mxu0 %v1445
    %2151 = vmatpush1.bf16.msra.mxu0 %v1444
    %2152 = vmatprep.subr.bf16.mxu0 %v1448
    %2153 = vmatpush1.bf16.msra.mxu0 %v1447
    %2154 = vmatprep.mubr.bf16.mxu0 %v2117
    %2155 = vmatmul.mubr.bf16.gmra.mrb[0].mxu0 %v2116
    %v2156 = vpop.f32.mrb[0].mxu0
    %v2157 = vadd.f32 %v1210, %v2156
    %v2158 = vpop.f32.mrb[0].mxu0
    %v2159 = vadd.f32 %v1214, %v2158
    %v2160 = vpop.f32.mrb[0].mxu0
    %v2161 = vadd.f32 %v1210, %v2160
    %v2162 = vpop.f32.mrb[0].mxu0
    %v2163 = vadd.f32 %v1214, %v2162
    %2164 = vdwg.mxu0
    %2165 = vmatprep.subr.bf16.mxu0 %v1451
    %2166 = vmatpush1.bf16.msra.mxu0 %v1450
    %2167 = vmatprep.subr.bf16.mxu0 %v1454
    %2168 = vmatpush1.bf16.msra.mxu0 %v1453
    %2169 = vmatprep.subr.bf16.mxu0 0
    %2170 = vmatpush1.bf16.msra.mxu0 0
    %2171 = vmatprep.subr.bf16.mxu0 0
    %2172 = vmatpush1.bf16.msra.mxu0 0
    %2173 = vmatprep.subr.bf16.mxu0 0
    %2174 = vmatpush1.bf16.msra.mxu0 0
    %2175 = vmatprep.subr.bf16.mxu0 0
    %2176 = vmatpush1.bf16.msra.mxu0 0
    %2177 = vmatprep.subr.bf16.mxu0 0
    %2178 = vmatpush1.bf16.msra.mxu0 0
    %2179 = vmatprep.subr.bf16.mxu0 0
    %2180 = vmatpush1.bf16.msra.mxu0 0
    %2181 = vmatprep.subr.bf16.mxu0 0
    %2182 = vmatpush1.bf16.msra.mxu0 0
    %2183 = vmatprep.subr.bf16.mxu0 0
    %2184 = vmatpush1.bf16.msra.mxu0 0
    %2185 = vmatprep.subr.bf16.mxu0 0
    %2186 = vmatpush1.bf16.msra.mxu0 0
    %2187 = vmatprep.subr.bf16.mxu0 0
    %2188 = vmatpush1.bf16.msra.mxu0 0
    %2189 = vmatprep.subr.bf16.mxu0 0
    %2190 = vmatpush1.bf16.msra.mxu0 0
    %2191 = vmatprep.subr.bf16.mxu0 0
    %2192 = vmatpush1.bf16.msra.mxu0 0
    %2193 = vmatprep.subr.bf16.mxu0 0
    %2194 = vmatpush1.bf16.msra.mxu0 0
    %2195 = vmatprep.subr.bf16.mxu0 0
    %2196 = vmatpush1.bf16.msra.mxu0 0
    %2197 = vmatprep.mubr.bf16.mxu0 0
    %2198 = vmatmul.mubr.bf16.gmra.mrb[0].mxu0 %v2120
    %v2199 = vpop.f32.mrb[0].mxu0
    %v2200 = vadd.f32 %v2157, %v2199
    %v2201 = vpop.f32.mrb[0].mxu0
    %v2202 = vadd.f32 %v2159, %v2201
    %v2203 = vpop.f32.mrb[0].mxu0
    %v2204 = vadd.f32 %v2161, %v2203
    %v2205 = vpop.f32.mrb[0].mxu0
    %v2206 = vadd.f32 %v2163, %v2205
    %2207 = vdwg.mxu0
    %2208 = vmatprep.subr.bf16.mxu0 0
    %2209 = vmatpush1.bf16.msra.mxu0 %v1404
    %2210 = vmatprep.subr.bf16.mxu0 0
    %2211 = vmatpush1.bf16.msra.mxu0 %v1407
    %2212 = vmatprep.subr.bf16.mxu0 0
    %2213 = vmatpush1.bf16.msra.mxu0 %v1410
    %2214 = vmatprep.subr.bf16.mxu0 0
    %2215 = vmatpush1.bf16.msra.mxu0 %v1413
    %2216 = vmatprep.subr.bf16.mxu0 0
    %2217 = vmatpush1.bf16.msra.mxu0 %v1416
    %2218 = vmatprep.subr.bf16.mxu0 0
    %2219 = vmatpush1.bf16.msra.mxu0 %v1419
    %2220 = vmatprep.subr.bf16.mxu0 0
    %2221 = vmatpush1.bf16.msra.mxu0 %v1422
    %2222 = vmatprep.subr.bf16.mxu0 0
    %2223 = vmatpush1.bf16.msra.mxu0 %v1425
    %2224 = vmatprep.subr.bf16.mxu0 0
    %2225 = vmatpush1.bf16.msra.mxu0 %v1428
    %2226 = vmatprep.subr.bf16.mxu0 0
    %2227 = vmatpush1.bf16.msra.mxu0 %v1431
    %2228 = vmatprep.subr.bf16.mxu0 0
    %2229 = vmatpush1.bf16.msra.mxu0 %v1434
    %2230 = vmatprep.subr.bf16.mxu0 0
    %2231 = vmatpush1.bf16.msra.mxu0 %v1437
    %2232 = vmatprep.subr.bf16.mxu0 0
    %2233 = vmatpush1.bf16.msra.mxu0 %v1440
    %2234 = vmatprep.subr.bf16.mxu0 0
    %2235 = vmatpush1.bf16.msra.mxu0 %v1443
    %2236 = vmatprep.subr.bf16.mxu0 0
    %2237 = vmatpush1.bf16.msra.mxu0 %v1446
    %2238 = vmatprep.subr.bf16.mxu0 0
    %2239 = vmatpush1.bf16.msra.mxu0 %v1449
    %2240 = vmatprep.mubr.bf16.mxu0 %v2117
    %2241 = vmatmul.mubr.bf16.gmra.mrb[0].mxu0 %v2116
    %v2242 = vpop.f32.mrb[0].mxu0
    %v2243 = vadd.f32 %v1218, %v2242
    %v2244 = vpop.f32.mrb[0].mxu0
    %v2245 = vpop.f32.mrb[0].mxu0
    %v2246 = vadd.f32 %v1218, %v2245
    %v2247 = vpop.f32.mrb[0].mxu0
    %2248 = vdwg.mxu0
    %2249 = vmatprep.subr.bf16.mxu0 0
    %2250 = vmatpush1.bf16.msra.mxu0 %v1452
    %2251 = vmatprep.subr.bf16.mxu0 0
    %2252 = vmatpush1.bf16.msra.mxu0 %v1455
    %2253 = vmatprep.subr.bf16.mxu0 0
    %2254 = vmatpush1.bf16.msra.mxu0 0
    %2255 = vmatprep.subr.bf16.mxu0 0
    %2256 = vmatpush1.bf16.msra.mxu0 0
    %2257 = vmatprep.subr.bf16.mxu0 0
    %2258 = vmatpush1.bf16.msra.mxu0 0
    %2259 = vmatprep.subr.bf16.mxu0 0
    %2260 = vmatpush1.bf16.msra.mxu0 0
    %2261 = vmatprep.subr.bf16.mxu0 0
    %2262 = vmatpush1.bf16.msra.mxu0 0
    %2263 = vmatprep.subr.bf16.mxu0 0
    %2264 = vmatpush1.bf16.msra.mxu0 0
    %2265 = vmatprep.subr.bf16.mxu0 0
    %2266 = vmatpush1.bf16.msra.mxu0 0
    %2267 = vmatprep.subr.bf16.mxu0 0
    %2268 = vmatpush1.bf16.msra.mxu0 0
    %2269 = vmatprep.subr.bf16.mxu0 0
    %2270 = vmatpush1.bf16.msra.mxu0 0
    %2271 = vmatprep.subr.bf16.mxu0 0
    %2272 = vmatpush1.bf16.msra.mxu0 0
    %2273 = vmatprep.subr.bf16.mxu0 0
    %2274 = vmatpush1.bf16.msra.mxu0 0
    %2275 = vmatprep.subr.bf16.mxu0 0
    %2276 = vmatpush1.bf16.msra.mxu0 0
    %2277 = vmatprep.subr.bf16.mxu0 0
    %2278 = vmatpush1.bf16.msra.mxu0 0
    %2279 = vmatprep.subr.bf16.mxu0 0
    %2280 = vmatpush1.bf16.msra.mxu0 0
    %2281 = vmatprep.mubr.bf16.mxu0 0
    %2282 = vmatmul.mubr.bf16.gmra.mrb[0].mxu0 %v2120
    %v2283 = vpop.f32.mrb[0].mxu0
    %v2284 = vadd.f32 %v2243, %v2283
    %v2285 = vpop.f32.mrb[0].mxu0
    %v2286 = vpop.f32.mrb[0].mxu0
    %v2287 = vadd.f32 %v2246, %v2286
    %v2288 = vpop.f32.mrb[0].mxu0
    %2289 = vdwg.mxu0
    %v2290 = vmax.f32 %v2200, 0.0
    %v2291 = vmax.f32 %v2202, 0.0
    %v2292 = vmax.f32 %v2284, 0.0
    %v2293 = vmax.f32 %v2204, 0.0
    %v2294 = vmax.f32 %v2206, 0.0
    %v2295 = vmax.f32 %v2287, 0.0
    %v2296 = vpack.c.bf16 %v2293, %v2290
    %v2297 = vpack.c.bf16 %v2294, %v2291
    %v2298 = vpack.c.bf16 %v2295, %v2292
    %v2300 = vsel %vm1510, %v2298, 0
    %2302 = vmatprep.subr.bf16.mxu0 0
    %2303 = vmatpush1.bf16.msra.mxu0 %v1768
    %2304 = vmatprep.subr.bf16.mxu0 0
    %2305 = vmatpush1.bf16.msra.mxu0 %v1769
    %2306 = vmatprep.subr.bf16.mxu0 0
    %2307 = vmatpush1.bf16.msra.mxu0 %v1770
    %2308 = vmatprep.subr.bf16.mxu0 0
    %2309 = vmatpush1.bf16.msra.mxu0 %v1771
    %2310 = vmatprep.subr.bf16.mxu0 0
    %2311 = vmatpush1.bf16.msra.mxu0 %v1772
    %2312 = vmatprep.subr.bf16.mxu0 0
    %2313 = vmatpush1.bf16.msra.mxu0 %v1773
    %2314 = vmatprep.subr.bf16.mxu0 0
    %2315 = vmatpush1.bf16.msra.mxu0 %v1774
    %2316 = vmatprep.subr.bf16.mxu0 0
    %2317 = vmatpush1.bf16.msra.mxu0 %v1775
    %2318 = vmatprep.subr.bf16.mxu0 0
    %2319 = vmatpush1.bf16.msra.mxu0 %v1776
    %2320 = vmatprep.subr.bf16.mxu0 0
    %2321 = vmatpush1.bf16.msra.mxu0 %v1777
    %2322 = vmatprep.subr.bf16.mxu0 0
    %2323 = vmatpush1.bf16.msra.mxu0 %v1778
    %2324 = vmatprep.subr.bf16.mxu0 0
    %2325 = vmatpush1.bf16.msra.mxu0 %v1779
    %2326 = vmatprep.subr.bf16.mxu0 0
    %2327 = vmatpush1.bf16.msra.mxu0 %v1780
    %2328 = vmatprep.subr.bf16.mxu0 0
    %2329 = vmatpush1.bf16.msra.mxu0 %v1781
    %2330 = vmatprep.subr.bf16.mxu0 0
    %2331 = vmatpush1.bf16.msra.mxu0 %v1782
    %2332 = vmatprep.subr.bf16.mxu0 0
    %2333 = vmatpush1.bf16.msra.mxu0 %v1783
    %2334 = vmatprep.mubr.bf16.mxu0 %v2297
    %2335 = vmatmul.mubr.bf16.gmra.mrb[0].mxu0 %v2296
    %v2336 = vpop.f32.mrb[0].mxu0
    %v2337 = vadd.f32 %v1695, %v2336
    %v2338 = vpop.f32.mrb[0].mxu0
    %v2339 = vpop.f32.mrb[0].mxu0
    %v2340 = vadd.f32 %v1695, %v2339
    %v2341 = vpop.f32.mrb[0].mxu0
    %2342 = vdwg.mxu0
    %2343 = vmatprep.subr.bf16.mxu0 0
    %2344 = vmatpush1.bf16.msra.mxu0 %v1784
    %2345 = vmatprep.subr.bf16.mxu0 0
    %2346 = vmatpush1.bf16.msra.mxu0 %v1785
    %2347 = vmatprep.subr.bf16.mxu0 0
    %2348 = vmatpush1.bf16.msra.mxu0 0
    %2349 = vmatprep.subr.bf16.mxu0 0
    %2350 = vmatpush1.bf16.msra.mxu0 0
    %2351 = vmatprep.subr.bf16.mxu0 0
    %2352 = vmatpush1.bf16.msra.mxu0 0
    %2353 = vmatprep.subr.bf16.mxu0 0
    %2354 = vmatpush1.bf16.msra.mxu0 0
    %2355 = vmatprep.subr.bf16.mxu0 0
    %2356 = vmatpush1.bf16.msra.mxu0 0
    %2357 = vmatprep.subr.bf16.mxu0 0
    %2358 = vmatpush1.bf16.msra.mxu0 0
    %2359 = vmatprep.subr.bf16.mxu0 0
    %2360 = vmatpush1.bf16.msra.mxu0 0
    %2361 = vmatprep.subr.bf16.mxu0 0
    %2362 = vmatpush1.bf16.msra.mxu0 0
    %2363 = vmatprep.subr.bf16.mxu0 0
    %2364 = vmatpush1.bf16.msra.mxu0 0
    %2365 = vmatprep.subr.bf16.mxu0 0
    %2366 = vmatpush1.bf16.msra.mxu0 0
    %2367 = vmatprep.subr.bf16.mxu0 0
    %2368 = vmatpush1.bf16.msra.mxu0 0
    %2369 = vmatprep.subr.bf16.mxu0 0
    %2370 = vmatpush1.bf16.msra.mxu0 0
    %2371 = vmatprep.subr.bf16.mxu0 0
    %2372 = vmatpush1.bf16.msra.mxu0 0
    %2373 = vmatprep.subr.bf16.mxu0 0
    %2374 = vmatpush1.bf16.msra.mxu0 0
    %2375 = vmatprep.mubr.bf16.mxu0 0
    %2376 = vmatmul.mubr.bf16.gmra.mrb[0].mxu0 %v2300
    %v2377 = vpop.f32.mrb[0].mxu0
    %v2378 = vadd.f32 %v2337, %v2377
    %v2379 = vpop.f32.mrb[0].mxu0
    %v2380 = vpop.f32.mrb[0].mxu0
    %v2381 = vadd.f32 %v2340, %v2380
    %v2382 = vpop.f32.mrb[0].mxu0
    %2383 = vdwg.mxu0
    %v2384 = vadd.f32 %v1883, %v2378
    %v2385 = vadd.f32 %v1886, %v2381
    %s2386 = scalar_lea.vmem [#allocation2], 16
    %2387 = vst [vmem:[%s2386] sm:$0xff] %v2384
    %2388 = vst [vmem:[%s2386 + $0x8] sm:$0xff] %v2385
    %v2389 = vpack.c.bf16 %v2385, %v2384
    %2390 = vmatprep.subr.bf16.mxu0 %v1973
    %2391 = vmatpush1.bf16.msra.mxu0 %v1972
    %2392 = vmatprep.subr.bf16.mxu0 %v1976
    %2393 = vmatpush1.bf16.msra.mxu0 %v1975
    %2394 = vmatprep.subr.bf16.mxu0 %v1979
    %2395 = vmatpush1.bf16.msra.mxu0 %v1978
    %2396 = vmatprep.subr.bf16.mxu0 %v1982
    %2397 = vmatpush1.bf16.msra.mxu0 %v1981
    %2398 = vmatprep.subr.bf16.mxu0 %v1985
    %2399 = vmatpush1.bf16.msra.mxu0 %v1984
    %2400 = vmatprep.subr.bf16.mxu0 %v1988
    %2401 = vmatpush1.bf16.msra.mxu0 %v1987
    %2402 = vmatprep.subr.bf16.mxu0 %v1991
    %2403 = vmatpush1.bf16.msra.mxu0 %v1990
    %2404 = vmatprep.subr.bf16.mxu0 %v1994
    %2405 = vmatpush1.bf16.msra.mxu0 %v1993
    %2406 = vmatprep.subr.bf16.mxu0 0
    %2407 = vmatpush1.bf16.msra.mxu0 0
    %2408 = vmatprep.subr.bf16.mxu0 0
    %2409 = vmatpush1.bf16.msra.mxu0 0
    %2410 = vmatprep.subr.bf16.mxu0 0
    %2411 = vmatpush1.bf16.msra.mxu0 0
    %2412 = vmatprep.subr.bf16.mxu0 0
    %2413 = vmatpush1.bf16.msra.mxu0 0
    %2414 = vmatprep.subr.bf16.mxu0 0
    %2415 = vmatpush1.bf16.msra.mxu0 0
    %2416 = vmatprep.subr.bf16.mxu0 0
    %2417 = vmatpush1.bf16.msra.mxu0 0
    %2418 = vmatprep.subr.bf16.mxu0 0
    %2419 = vmatpush1.bf16.msra.mxu0 0
    %2420 = vmatprep.subr.bf16.mxu0 0
    %2421 = vmatpush1.bf16.msra.mxu0 0
    %2422 = vmatprep.mubr.bf16.mxu0 0
    %2423 = vmatmul.mubr.bf16.gmra.mrb[0].mxu0 %v2389
    %v2424 = vpop.f32.mrb[0].mxu0
    %v2425 = vadd.f32 0.0, %v2424
    %v2426 = vpop.f32.mrb[0].mxu0
    %v2427 = vadd.f32 0.0, %v2426
    %v2428 = vpop.f32.mrb[0].mxu0
    %v2429 = vadd.f32 0.0, %v2428
    %v2430 = vpop.f32.mrb[0].mxu0
    %v2431 = vadd.f32 0.0, %v2430
    %2432 = vdwg.mxu0
    %2433 = vmatprep.subr.bf16.mxu0 0
    %2434 = vmatpush1.bf16.msra.mxu0 %v1974
    %2435 = vmatprep.subr.bf16.mxu0 0
    %2436 = vmatpush1.bf16.msra.mxu0 %v1977
    %2437 = vmatprep.subr.bf16.mxu0 0
    %2438 = vmatpush1.bf16.msra.mxu0 %v1980
    %2439 = vmatprep.subr.bf16.mxu0 0
    %2440 = vmatpush1.bf16.msra.mxu0 %v1983
    %2441 = vmatprep.subr.bf16.mxu0 0
    %2442 = vmatpush1.bf16.msra.mxu0 %v1986
    %2443 = vmatprep.subr.bf16.mxu0 0
    %2444 = vmatpush1.bf16.msra.mxu0 %v1989
    %2445 = vmatprep.subr.bf16.mxu0 0
    %2446 = vmatpush1.bf16.msra.mxu0 %v1992
    %2447 = vmatprep.subr.bf16.mxu0 0
    %2448 = vmatpush1.bf16.msra.mxu0 %v1995
    %2449 = vmatprep.subr.bf16.mxu0 0
    %2450 = vmatpush1.bf16.msra.mxu0 0
    %2451 = vmatprep.subr.bf16.mxu0 0
    %2452 = vmatpush1.bf16.msra.mxu0 0
    %2453 = vmatprep.subr.bf16.mxu0 0
    %2454 = vmatpush1.bf16.msra.mxu0 0
    %2455 = vmatprep.subr.bf16.mxu0 0
    %2456 = vmatpush1.bf16.msra.mxu0 0
    %2457 = vmatprep.subr.bf16.mxu0 0
    %2458 = vmatpush1.bf16.msra.mxu0 0
    %2459 = vmatprep.subr.bf16.mxu0 0
    %2460 = vmatpush1.bf16.msra.mxu0 0
    %2461 = vmatprep.subr.bf16.mxu0 0
    %2462 = vmatpush1.bf16.msra.mxu0 0
    %2463 = vmatprep.subr.bf16.mxu0 0
    %2464 = vmatpush1.bf16.msra.mxu0 0
    %2465 = vmatprep.mubr.bf16.mxu0 0
    %2466 = vmatmul.mubr.bf16.gmra.mrb[0].mxu0 %v2389
    %v2467 = vpop.f32.mrb[0].mxu0
    %v2468 = vadd.f32 0.0, %v2467
    %v2469 = vpop.f32.mrb[0].mxu0
    %v2470 = vpop.f32.mrb[0].mxu0
    %v2471 = vadd.f32 0.0, %v2470
    %v2472 = vpop.f32.mrb[0].mxu0
    %2473 = vdwg.mxu0
    %v2474 = vadd.f32 %v1066, %v2425
    %v2475 = vadd.f32 %v1068, %v2427
    %v2476 = vadd.f32 %v1191, %v2468
    %v2477 = vadd.f32 %v1070, %v2429
    %v2478 = vadd.f32 %v1072, %v2431
    %v2479 = vadd.f32 %v1194, %v2471
    %v2480 = vmax.f32 %v2474, 0.0
    %v2481 = vmax.f32 %v2475, 0.0
    %v2482 = vmax.f32 %v2476, 0.0
    %v2483 = vmax.f32 %v2477, 0.0
    %v2484 = vmax.f32 %v2478, 0.0
    %v2485 = vmax.f32 %v2479, 0.0
    %v2486 = vpack.c.bf16 %v2483, %v2480
    %v2487 = vpack.c.bf16 %v2484, %v2481
    %v2488 = vpack.c.bf16 %v2485, %v2482
    %v2490 = vsel %vm1510, %v2488, 0
    %2492 = vmatprep.subr.bf16.mxu0 %v1403
    %2493 = vmatpush1.bf16.msra.mxu0 %v1402
    %2494 = vmatprep.subr.bf16.mxu0 %v1406
    %2495 = vmatpush1.bf16.msra.mxu0 %v1405
    %2496 = vmatprep.subr.bf16.mxu0 %v1409
    %2497 = vmatpush1.bf16.msra.mxu0 %v1408
    %2498 = vmatprep.subr.bf16.mxu0 %v1412
    %2499 = vmatpush1.bf16.msra.mxu0 %v1411
    %2500 = vmatprep.subr.bf16.mxu0 %v1415
    %2501 = vmatpush1.bf16.msra.mxu0 %v1414
    %2502 = vmatprep.subr.bf16.mxu0 %v1418
    %2503 = vmatpush1.bf16.msra.mxu0 %v1417
    %2504 = vmatprep.subr.bf16.mxu0 %v1421
    %2505 = vmatpush1.bf16.msra.mxu0 %v1420
    %2506 = vmatprep.subr.bf16.mxu0 %v1424
    %2507 = vmatpush1.bf16.msra.mxu0 %v1423
    %2508 = vmatprep.subr.bf16.mxu0 %v1427
    %2509 = vmatpush1.bf16.msra.mxu0 %v1426
    %2510 = vmatprep.subr.bf16.mxu0 %v1430
    %2511 = vmatpush1.bf16.msra.mxu0 %v1429
    %2512 = vmatprep.subr.bf16.mxu0 %v1433
    %2513 = vmatpush1.bf16.msra.mxu0 %v1432
    %2514 = vmatprep.subr.bf16.mxu0 %v1436
    %2515 = vmatpush1.bf16.msra.mxu0 %v1435
    %2516 = vmatprep.subr.bf16.mxu0 %v1439
    %2517 = vmatpush1.bf16.msra.mxu0 %v1438
    %2518 = vmatprep.subr.bf16.mxu0 %v1442
    %2519 = vmatpush1.bf16.msra.mxu0 %v1441
    %2520 = vmatprep.subr.bf16.mxu0 %v1445
    %2521 = vmatpush1.bf16.msra.mxu0 %v1444
    %2522 = vmatprep.subr.bf16.mxu0 %v1448
    %2523 = vmatpush1.bf16.msra.mxu0 %v1447
    %2524 = vmatprep.mubr.bf16.mxu0 %v2487
    %2525 = vmatmul.mubr.bf16.gmra.mrb[0].mxu0 %v2486
    %v2526 = vpop.f32.mrb[0].mxu0
    %v2527 = vadd.f32 %v1210, %v2526
    %v2528 = vpop.f32.mrb[0].mxu0
    %v2529 = vadd.f32 %v1214, %v2528
    %v2530 = vpop.f32.mrb[0].mxu0
    %v2531 = vadd.f32 %v1210, %v2530
    %v2532 = vpop.f32.mrb[0].mxu0
    %v2533 = vadd.f32 %v1214, %v2532
    %2534 = vdwg.mxu0
    %2535 = vmatprep.subr.bf16.mxu0 %v1451
    %2536 = vmatpush1.bf16.msra.mxu0 %v1450
    %2537 = vmatprep.subr.bf16.mxu0 %v1454
    %2538 = vmatpush1.bf16.msra.mxu0 %v1453
    %2539 = vmatprep.subr.bf16.mxu0 0
    %2540 = vmatpush1.bf16.msra.mxu0 0
    %2541 = vmatprep.subr.bf16.mxu0 0
    %2542 = vmatpush1.bf16.msra.mxu0 0
    %2543 = vmatprep.subr.bf16.mxu0 0
    %2544 = vmatpush1.bf16.msra.mxu0 0
    %2545 = vmatprep.subr.bf16.mxu0 0
    %2546 = vmatpush1.bf16.msra.mxu0 0
    %2547 = vmatprep.subr.bf16.mxu0 0
    %2548 = vmatpush1.bf16.msra.mxu0 0
    %2549 = vmatprep.subr.bf16.mxu0 0
    %2550 = vmatpush1.bf16.msra.mxu0 0
    %2551 = vmatprep.subr.bf16.mxu0 0
    %2552 = vmatpush1.bf16.msra.mxu0 0
    %2553 = vmatprep.subr.bf16.mxu0 0
    %2554 = vmatpush1.bf16.msra.mxu0 0
    %2555 = vmatprep.subr.bf16.mxu0 0
    %2556 = vmatpush1.bf16.msra.mxu0 0
    %2557 = vmatprep.subr.bf16.mxu0 0
    %2558 = vmatpush1.bf16.msra.mxu0 0
    %2559 = vmatprep.subr.bf16.mxu0 0
    %2560 = vmatpush1.bf16.msra.mxu0 0
    %2561 = vmatprep.subr.bf16.mxu0 0
    %2562 = vmatpush1.bf16.msra.mxu0 0
    %2563 = vmatprep.subr.bf16.mxu0 0
    %2564 = vmatpush1.bf16.msra.mxu0 0
    %2565 = vmatprep.subr.bf16.mxu0 0
    %2566 = vmatpush1.bf16.msra.mxu0 0
    %2567 = vmatprep.mubr.bf16.mxu0 0
    %2568 = vmatmul.mubr.bf16.gmra.mrb[0].mxu0 %v2490
    %v2569 = vpop.f32.mrb[0].mxu0
    %v2570 = vadd.f32 %v2527, %v2569
    %v2571 = vpop.f32.mrb[0].mxu0
    %v2572 = vadd.f32 %v2529, %v2571
    %v2573 = vpop.f32.mrb[0].mxu0
    %v2574 = vadd.f32 %v2531, %v2573
    %v2575 = vpop.f32.mrb[0].mxu0
    %v2576 = vadd.f32 %v2533, %v2575
    %2577 = vdwg.mxu0
    %2578 = vmatprep.subr.bf16.mxu0 0
    %2579 = vmatpush1.bf16.msra.mxu0 %v1404
    %2580 = vmatprep.subr.bf16.mxu0 0
    %2581 = vmatpush1.bf16.msra.mxu0 %v1407
    %2582 = vmatprep.subr.bf16.mxu0 0
    %2583 = vmatpush1.bf16.msra.mxu0 %v1410
    %2584 = vmatprep.subr.bf16.mxu0 0
    %2585 = vmatpush1.bf16.msra.mxu0 %v1413
    %2586 = vmatprep.subr.bf16.mxu0 0
    %2587 = vmatpush1.bf16.msra.mxu0 %v1416
    %2588 = vmatprep.subr.bf16.mxu0 0
    %2589 = vmatpush1.bf16.msra.mxu0 %v1419
    %2590 = vmatprep.subr.bf16.mxu0 0
    %2591 = vmatpush1.bf16.msra.mxu0 %v1422
    %2592 = vmatprep.subr.bf16.mxu0 0
    %2593 = vmatpush1.bf16.msra.mxu0 %v1425
    %2594 = vmatprep.subr.bf16.mxu0 0
    %2595 = vmatpush1.bf16.msra.mxu0 %v1428
    %2596 = vmatprep.subr.bf16.mxu0 0
    %2597 = vmatpush1.bf16.msra.mxu0 %v1431
    %2598 = vmatprep.subr.bf16.mxu0 0
    %2599 = vmatpush1.bf16.msra.mxu0 %v1434
    %2600 = vmatprep.subr.bf16.mxu0 0
    %2601 = vmatpush1.bf16.msra.mxu0 %v1437
    %2602 = vmatprep.subr.bf16.mxu0 0
    %2603 = vmatpush1.bf16.msra.mxu0 %v1440
    %2604 = vmatprep.subr.bf16.mxu0 0
    %2605 = vmatpush1.bf16.msra.mxu0 %v1443
    %2606 = vmatprep.subr.bf16.mxu0 0
    %2607 = vmatpush1.bf16.msra.mxu0 %v1446
    %2608 = vmatprep.subr.bf16.mxu0 0
    %2609 = vmatpush1.bf16.msra.mxu0 %v1449
    %2610 = vmatprep.mubr.bf16.mxu0 %v2487
    %2611 = vmatmul.mubr.bf16.gmra.mrb[0].mxu0 %v2486
    %v2612 = vpop.f32.mrb[0].mxu0
    %v2613 = vadd.f32 %v1218, %v2612
    %v2614 = vpop.f32.mrb[0].mxu0
    %v2615 = vpop.f32.mrb[0].mxu0
    %v2616 = vadd.f32 %v1218, %v2615
    %v2617 = vpop.f32.mrb[0].mxu0
    %2618 = vdwg.mxu0
    %2619 = vmatprep.subr.bf16.mxu0 0
    %2620 = vmatpush1.bf16.msra.mxu0 %v1452
    %2621 = vmatprep.subr.bf16.mxu0 0
    %2622 = vmatpush1.bf16.msra.mxu0 %v1455
    %2623 = vmatprep.subr.bf16.mxu0 0
    %2624 = vmatpush1.bf16.msra.mxu0 0
    %2625 = vmatprep.subr.bf16.mxu0 0
    %2626 = vmatpush1.bf16.msra.mxu0 0
    %2627 = vmatprep.subr.bf16.mxu0 0
    %2628 = vmatpush1.bf16.msra.mxu0 0
    %2629 = vmatprep.subr.bf16.mxu0 0
    %2630 = vmatpush1.bf16.msra.mxu0 0
    %2631 = vmatprep.subr.bf16.mxu0 0
    %2632 = vmatpush1.bf16.msra.mxu0 0
    %2633 = vmatprep.subr.bf16.mxu0 0
    %2634 = vmatpush1.bf16.msra.mxu0 0
    %2635 = vmatprep.subr.bf16.mxu0 0
    %2636 = vmatpush1.bf16.msra.mxu0 0
    %2637 = vmatprep.subr.bf16.mxu0 0
    %2638 = vmatpush1.bf16.msra.mxu0 0
    %2639 = vmatprep.subr.bf16.mxu0 0
    %2640 = vmatpush1.bf16.msra.mxu0 0
    %2641 = vmatprep.subr.bf16.mxu0 0
    %2642 = vmatpush1.bf16.msra.mxu0 0
    %2643 = vmatprep.subr.bf16.mxu0 0
    %2644 = vmatpush1.bf16.msra.mxu0 0
    %2645 = vmatprep.subr.bf16.mxu0 0
    %2646 = vmatpush1.bf16.msra.mxu0 0
    %2647 = vmatprep.subr.bf16.mxu0 0
    %2648 = vmatpush1.bf16.msra.mxu0 0
    %2649 = vmatprep.subr.bf16.mxu0 0
    %2650 = vmatpush1.bf16.msra.mxu0 0
    %2651 = vmatprep.mubr.bf16.mxu0 0
    %2652 = vmatmul.mubr.bf16.gmra.mrb[0].mxu0 %v2490
    %v2653 = vpop.f32.mrb[0].mxu0
    %v2654 = vadd.f32 %v2613, %v2653
    %v2655 = vpop.f32.mrb[0].mxu0
    %v2656 = vpop.f32.mrb[0].mxu0
    %v2657 = vadd.f32 %v2616, %v2656
    %v2658 = vpop.f32.mrb[0].mxu0
    %2659 = vdwg.mxu0
    %v2660 = vmax.f32 %v2570, 0.0
    %v2661 = vmax.f32 %v2572, 0.0
    %v2662 = vmax.f32 %v2654, 0.0
    %v2663 = vmax.f32 %v2574, 0.0
    %v2664 = vmax.f32 %v2576, 0.0
    %v2665 = vmax.f32 %v2657, 0.0
    %v2666 = vpack.c.bf16 %v2663, %v2660
    %v2667 = vpack.c.bf16 %v2664, %v2661
    %v2668 = vpack.c.bf16 %v2665, %v2662
    %v2670 = vsel %vm1510, %v2668, 0
    %2672 = vmatprep.subr.bf16.mxu0 0
    %2673 = vmatpush1.bf16.msra.mxu0 %v1768
    %2674 = vmatprep.subr.bf16.mxu0 0
    %2675 = vmatpush1.bf16.msra.mxu0 %v1769
    %2676 = vmatprep.subr.bf16.mxu0 0
    %2677 = vmatpush1.bf16.msra.mxu0 %v1770
    %2678 = vmatprep.subr.bf16.mxu0 0
    %2679 = vmatpush1.bf16.msra.mxu0 %v1771
    %2680 = vmatprep.subr.bf16.mxu0 0
    %2681 = vmatpush1.bf16.msra.mxu0 %v1772
    %2682 = vmatprep.subr.bf16.mxu0 0
    %2683 = vmatpush1.bf16.msra.mxu0 %v1773
    %2684 = vmatprep.subr.bf16.mxu0 0
    %2685 = vmatpush1.bf16.msra.mxu0 %v1774
    %2686 = vmatprep.subr.bf16.mxu0 0
    %2687 = vmatpush1.bf16.msra.mxu0 %v1775
    %2688 = vmatprep.subr.bf16.mxu0 0
    %2689 = vmatpush1.bf16.msra.mxu0 %v1776
    %2690 = vmatprep.subr.bf16.mxu0 0
    %2691 = vmatpush1.bf16.msra.mxu0 %v1777
    %2692 = vmatprep.subr.bf16.mxu0 0
    %2693 = vmatpush1.bf16.msra.mxu0 %v1778
    %2694 = vmatprep.subr.bf16.mxu0 0
    %2695 = vmatpush1.bf16.msra.mxu0 %v1779
    %2696 = vmatprep.subr.bf16.mxu0 0
    %2697 = vmatpush1.bf16.msra.mxu0 %v1780
    %2698 = vmatprep.subr.bf16.mxu0 0
    %2699 = vmatpush1.bf16.msra.mxu0 %v1781
    %2700 = vmatprep.subr.bf16.mxu0 0
    %2701 = vmatpush1.bf16.msra.mxu0 %v1782
    %2702 = vmatprep.subr.bf16.mxu0 0
    %2703 = vmatpush1.bf16.msra.mxu0 %v1783
    %2704 = vmatprep.mubr.bf16.mxu0 %v2667
    %2705 = vmatmul.mubr.bf16.gmra.mrb[0].mxu0 %v2666
    %v2706 = vpop.f32.mrb[0].mxu0
    %v2707 = vadd.f32 %v1695, %v2706
    %v2708 = vpop.f32.mrb[0].mxu0
    %v2709 = vpop.f32.mrb[0].mxu0
    %v2710 = vadd.f32 %v1695, %v2709
    %v2711 = vpop.f32.mrb[0].mxu0
    %2712 = vdwg.mxu0
    %2713 = vmatprep.subr.bf16.mxu0 0
    %2714 = vmatpush1.bf16.msra.mxu0 %v1784
    %2715 = vmatprep.subr.bf16.mxu0 0
    %2716 = vmatpush1.bf16.msra.mxu0 %v1785
    %2717 = vmatprep.subr.bf16.mxu0 0
    %2718 = vmatpush1.bf16.msra.mxu0 0
    %2719 = vmatprep.subr.bf16.mxu0 0
    %2720 = vmatpush1.bf16.msra.mxu0 0
    %2721 = vmatprep.subr.bf16.mxu0 0
    %2722 = vmatpush1.bf16.msra.mxu0 0
    %2723 = vmatprep.subr.bf16.mxu0 0
    %2724 = vmatpush1.bf16.msra.mxu0 0
    %2725 = vmatprep.subr.bf16.mxu0 0
    %2726 = vmatpush1.bf16.msra.mxu0 0
    %2727 = vmatprep.subr.bf16.mxu0 0
    %2728 = vmatpush1.bf16.msra.mxu0 0
    %2729 = vmatprep.subr.bf16.mxu0 0
    %2730 = vmatpush1.bf16.msra.mxu0 0
    %2731 = vmatprep.subr.bf16.mxu0 0
    %2732 = vmatpush1.bf16.msra.mxu0 0
    %2733 = vmatprep.subr.bf16.mxu0 0
    %2734 = vmatpush1.bf16.msra.mxu0 0
    %2735 = vmatprep.subr.bf16.mxu0 0
    %2736 = vmatpush1.bf16.msra.mxu0 0
    %2737 = vmatprep.subr.bf16.mxu0 0
    %2738 = vmatpush1.bf16.msra.mxu0 0
    %2739 = vmatprep.subr.bf16.mxu0 0
    %2740 = vmatpush1.bf16.msra.mxu0 0
    %2741 = vmatprep.subr.bf16.mxu0 0
    %2742 = vmatpush1.bf16.msra.mxu0 0
    %2743 = vmatprep.subr.bf16.mxu0 0
    %2744 = vmatpush1.bf16.msra.mxu0 0
    %2745 = vmatprep.mubr.bf16.mxu0 0
    %2746 = vmatmul.mubr.bf16.gmra.mrb[0].mxu0 %v2670
    %v2747 = vpop.f32.mrb[0].mxu0
    %v2748 = vadd.f32 %v2707, %v2747
    %v2749 = vpop.f32.mrb[0].mxu0
    %v2750 = vpop.f32.mrb[0].mxu0
    %v2751 = vadd.f32 %v2710, %v2750
    %v2752 = vpop.f32.mrb[0].mxu0
    %2753 = vdwg.mxu0
    %v2754 = vadd.f32 %v2384, %v2748
    %v2755 = vadd.f32 %v2385, %v2751
    %s2756 = scalar_lea.vmem [#allocation2], 32
    %2757 = vst [vmem:[%s2756] sm:$0xff] %v2754
    %2758 = vst [vmem:[%s2756 + $0x8] sm:$0xff] %v2755
    // Predicated region
    $region34: #{tpu_custom_call.1} parent=1 // pred_check
      _
    $region35: #{tpu_custom_call.1} parent=1 // pred_check_branch
      %2760 = sbr.rel (0) target = $region37
    $region36: #{tpu_custom_call.1} parent=1 // pred_region
      %s2762 = ssub.s32 768, 768
      %2763 = vsyncadd [#allocation3], %s2762
      %s2764 = sshll.u32 [#allocation2], 4
      %s2765 = int_to_ptr.vmem [resolvable:$true] %s2764
      %2770 = dma.vmem_to_hbm [thread:$0]  %s2765, 768, %s8, [#allocation3], 128, 128, 8
    $region37: #{tpu_custom_call.1} parent=1 // pred_fallthru
      _
    // Predicated region
    $region38: #{tpu_custom_call.1} parent=1 // pred_check
      _
    $region39: #{tpu_custom_call.1} parent=1 // pred_check_branch
      %2772 = sbr.rel (0) target = $region41
    $region40: #{tpu_custom_call.1} parent=1 // pred_region
      %2773 = dma.done [#allocation3], 768
    $region41: #{tpu_custom_call.1} parent=1 // pred_fallthru
      _
    %2774 = vsyncpa [#allocation3], 1

</llo_original>
